<compile_context>
chip_gen: v7x
topology: tpu7x:2x2x1
jax: 0.10.0
libtpu: 0.0.40
codegen_flags: <defaults>
</compile_context>

<pallas_src>
import functools

import jax
import jax.numpy as jnp
from jax import lax
from jax.experimental import pallas as pl
from jax.experimental.pallas import tpu as pltpu


def _conv_kernel(x_ref, w_ref, b_ref, o_ref, *, K, stride, th, w_out):
    """One (batch, row-slab) grid step of the reflection-padded conv.

    x_ref: (1, Hp, Wp, C_in)   bf16  -- whole padded image (NHWC), resident
    w_ref: (C_out, K*K*C_in)   bf16  -- taps folded into the contraction dim
    b_ref: (C_out, 1)          f32
    o_ref: (1, C_out, th*w_out)      -- lane-dense NC(HW) output slab
    """
    t = pl.program_id(1)
    c_in = x_ref.shape[3]
    span = (th - 1) * stride + 1           # padded-input rows touched per kh tap
    row0 = t * (th * stride)

    # Build the folded im2col RHS (th*w_out, K*K*C_in) from the resident image:
    # one contiguous (span, Wp, C_in) load per kh, static window slices per kw.
    # The piece reshape keeps the minor (C_in) dim intact, so it is a cheap
    # leading-dim merge (free when w_out % 8 == 0).
    # TODO(synk): for stride > 1, de-interleave even/odd columns once per
    # resident image instead of paying a strided slice on every tap.
    pieces = []
    for kh in range(K):
        slab = x_ref[0, pl.ds(row0 + kh, span), :, :]          # (span, Wp, C_in)
        for kw in range(K):
            piece = lax.slice(
                slab,
                (0, kw, 0),
                (span, kw + 1 + (w_out - 1) * stride, c_in),
                (stride, stride, 1))                           # (th, w_out, C_in)
            pieces.append(piece.reshape(th * w_out, c_in))
    rhs = jnp.concatenate(pieces, axis=-1)                     # (th*w_out, K*K*C_in)

    # Single MXU contraction per slab: depth = K*K*C_in, lanes = th*w_out.
    acc = lax.dot_general(
        w_ref[...], rhs,
        dimension_numbers=(((1,), (1,)), ((), ())),
        preferred_element_type=jnp.float32)                    # (C_out, th*w_out) f32
    o_ref[0, :, :] = (acc + b_ref[...]).astype(o_ref.dtype)    # one unmasked store


def _tile_vmem_bytes(th, *, hp, wp, c_in, c_out, K, stride, w_out, out_itemsize):
    """Conservative per-step VMEM estimate for a given row-slab size."""
    t_lanes = th * w_out
    resident_in = 2 * hp * wp * c_in * 2           # double-buffered padded image (bf16)
    weights = 2 * (c_out * K * K * c_in * 2 + c_out * 4)
    out_tile = 2 * c_out * t_lanes * out_itemsize  # double-buffered output slab
    rhs = K * K * c_in * t_lanes * 2               # folded im2col slab (bf16)
    acc = c_out * t_lanes * 4                      # f32 MXU result
    slabs = K * ((th - 1) * stride + 1) * wp * c_in * 2
    return resident_in + weights + out_tile + rhs + acc + slabs + (1 << 20)


def _pick_row_tile(h_out, w_out, fits):
    """Output rows per grid step.

    th must divide h_out and give a lane-dense output block (th*w_out % 128
    == 0).  Pick the largest such tile that fits the VMEM budget, with a soft
    cap of ~4096 lanes so the pipeline still has a few steps to overlap.
    """
    cands = [d for d in range(h_out, 0, -1)
             if h_out % d == 0 and (d * w_out) % 128 == 0]
    preferred = [d for d in cands if d * w_out <= 4096] or cands
    for th in preferred:
        if fits(th):
            return th
    if cands:
        return cands[-1]   # smallest aligned tile; let the compiler manage VMEM
    # Tiny images: one slab covering the full flattened H*W axis.  Legal even
    # if < 128 lanes (block spans the whole axis); stores become masked, which
    # is acceptable only at these sizes.
    return h_out


def conv_layer_forward(x, weight, bias, stride):
    """ConvLayer.forward: ReflectionPad2d(K//2) -> Conv2d(stride=stride).

    x:      (N, C_in, H, W)      NCHW (PyTorch layout)
    weight: (C_out, C_in, K, K)
    bias:   (C_out,)
    returns (N, C_out, H_out, W_out)
    """
    N, C_in, H, W = x.shape
    C_out, _, K, _ = weight.shape
    pad = K // 2
    if pad > 0:
        assert pad < H and pad < W, "reflection pad requires pad < spatial dims"

    # JAX-side prep: NCHW -> NHWC relayout, reflection pad (matches
    # torch.nn.ReflectionPad2d), bf16 cast.
    # TODO(synk): do the reflection in-kernel on the resident image so the
    # kernel can read the original NCHW tensor directly and this extra HBM
    # prep pass disappears for memory-bound layers.
    x_nhwc = jnp.transpose(x, (0, 2, 3, 1))
    x_pad = jnp.pad(x_nhwc, ((0, 0), (pad, pad), (pad, pad), (0, 0)),
                    mode="reflect").astype(jnp.bfloat16)

    Hp, Wp = H + 2 * pad, W + 2 * pad
    H_out = (Hp - K) // stride + 1
    W_out = (Wp - K) // stride + 1
    out_itemsize = jnp.dtype(x.dtype).itemsize

    # VMEM cap: derive from the actual chip (64 MiB/TC on v7x, 128 MiB on
    # v5e/v6e) and leave headroom for compiler-internal scratch.
    try:
        vmem_cap = int(pltpu.get_tpu_info().vmem_capacity_bytes)
    except Exception:
        vmem_cap = 64 * 1024 * 1024    # v7x-safe lower bound
    vmem_limit = max(32 * 1024 * 1024,
                     min(int(vmem_cap * 0.85), vmem_cap - (8 << 20)))

    def fits(th):
        return _tile_vmem_bytes(
            th, hp=Hp, wp=Wp, c_in=C_in, c_out=C_out, K=K, stride=stride,
            w_out=W_out, out_itemsize=out_itemsize) <= vmem_limit

    th = _pick_row_tile(H_out, W_out, fits)
    assert H_out % th == 0
    n_t = H_out // th

    # Weights folded into the contraction dim, ordered (kh, kw, ci) to match
    # the kernel's RHS construction.  Bias as (C_out, 1) f32.
    w_r = jnp.transpose(weight, (0, 2, 3, 1)).reshape(C_out, K * K * C_in)
    w_r = w_r.astype(jnp.bfloat16)
    b_r = bias.reshape(C_out, 1).astype(jnp.float32)

    kernel = functools.partial(_conv_kernel, K=K, stride=stride, th=th,
                               w_out=W_out)

    flops = 2 * N * H_out * W_out * C_out * K * K * C_in + N * H_out * W_out * C_out
    bytes_accessed = (x_pad.size * 2 + w_r.size * 2 + b_r.size * 4
                      + N * C_out * H_out * W_out * out_itemsize)

    # v7x has 2 TensorCores: shard the batch axis across cores (each core then
    # DMAs only its own images); keep the row-slab axis "arbitrary" so a core
    # never duplicates a whole-image read.  Single-image inputs fall back to
    # sharding the slab axis (no duplication possible anyway).
    dim_sem = ("parallel", "arbitrary") if N > 1 else ("parallel", "parallel")

    out_flat = pl.pallas_call(
        kernel,
        out_shape=jax.ShapeDtypeStruct((N, C_out, H_out * W_out), x.dtype),
        grid_spec=pltpu.PrefetchScalarGridSpec(
            num_scalar_prefetch=0,
            grid=(N, n_t),
            in_specs=[
                # Whole padded image of one batch element; block index changes
                # only with n, so it stays resident across all its row slabs.
                pl.BlockSpec((1, Hp, Wp, C_in), lambda n, t: (n, 0, 0, 0)),
                pl.BlockSpec((C_out, K * K * C_in), lambda n, t: (0, 0)),
                pl.BlockSpec((C_out, 1), lambda n, t: (0, 0)),
            ],
            out_specs=pl.BlockSpec((1, C_out, th * W_out),
                                   lambda n, t: (n, 0, t)),
        ),
        compiler_params=pltpu.CompilerParams(
            dimension_semantics=dim_sem,
            vmem_limit_bytes=int(vmem_limit)),
        cost_estimate=pl.CostEstimate(flops=int(flops), transcendentals=0,
                                      bytes_accessed=int(bytes_accessed)),
    )(x_pad, w_r, b_r)

    # Free reshape (trailing-dim split): (N, C_out, H_out*W_out) -> NCHW.
    return out_flat.reshape(N, C_out, H_out, W_out)


def _reference_conv(x, weight, bias, stride):
    pad = weight.shape[-1] // 2
    x_pad = jnp.pad(x, ((0, 0), (0, 0), (pad, pad), (pad, pad)), mode="reflect")
    out = lax.conv_general_dilated(
        x_pad, weight, window_strides=(stride, stride), padding="VALID",
        dimension_numbers=("NCHW", "OIHW", "NCHW"))
    return out + bias.reshape(1, -1, 1, 1)


if __name__ == "__main__":
    # Small shapes consistent with the module: N=2, C_in=4, H=W=16,
    # C_out=8, kernel_size=3, stride=1.
    N, C_in, H, W = 2, 4, 16, 16
    C_out, K, stride = 8, 3, 1

    key = jax.random.PRNGKey(0)
    kx, kwt, kb = jax.random.split(key, 3)
    x = jax.random.normal(kx, (N, C_in, H, W), dtype=jnp.float32)
    # Deterministic synthetic parameters (Conv2d-shaped); not a checkpoint load.
    weight = jax.random.normal(kwt, (C_out, C_in, K, K), dtype=jnp.float32) * 0.1
    bias = jax.random.normal(kb, (C_out,), dtype=jnp.float32) * 0.1

    fwd = jax.jit(functools.partial(conv_layer_forward, stride=stride))
    out = jax.block_until_ready(fwd(x, weight, bias))

    ref = _reference_conv(x, weight, bias, stride)
    assert out.shape == ref.shape, (out.shape, ref.shape)
    # bf16 MXU inputs with f32 accumulation -> compare against the f32
    # reference with a correspondingly looser tolerance.
    err = float(jnp.max(jnp.abs(out - ref)))
    assert err < 3e-2, err
    print("KERNEL_OK")
</pallas_src>

<mosaic_0001>
module attributes {stable_mosaic.version = 11 : i64} {
  func.func @_conv_kernel(%arg0: i32, %arg1: i32, %arg2: memref<1x18x18x4xbf16, #tpu.memory_space<vmem>>, %arg3: memref<8x36xbf16, #tpu.memory_space<vmem>>, %arg4: memref<8x1xf32, #tpu.memory_space<vmem>>, %arg5: memref<1x8x256xf32, #tpu.memory_space<vmem>>) attributes {dimension_semantics = [#tpu.dimension_semantics<parallel>, #tpu.dimension_semantics<arbitrary>], iteration_bounds = array<i64: 2, 1>, scalar_prefetch = 0 : i64, scratch_operands = 0 : i64, tpu.core_type = #tpu.core_type<tc>, window_params = [{transform_indices = @transform_0, window_bounds = array<i64: 1, 18, 18, 4>}, {pipeline_mode = #tpu.pipeline_mode<synchronous>, transform_indices = @transform_1, window_bounds = array<i64: 8, 36>}, {pipeline_mode = #tpu.pipeline_mode<synchronous>, transform_indices = @transform_2, window_bounds = array<i64: 8, 1>}, {transform_indices = @transform_3, window_bounds = array<i64: 1, 8, 256>}]} {
    %c16_i32 = arith.constant 16 : i32
    %0 = arith.muli %arg1, %c16_i32 : i32
    %c0_i32 = arith.constant 0 : i32
    %1 = arith.addi %0, %c0_i32 : i32
    %c0 = arith.constant 0 : index
    %2 = arith.index_cast %1 : i32 to index
    %c0_0 = arith.constant 0 : index
    %c0_1 = arith.constant 0 : index
    %3 = vector.load %arg2[%c0, %2, %c0_0, %c0_1] : memref<1x18x18x4xbf16, #tpu.memory_space<vmem>>, vector<1x16x18x4xbf16>
    %4 = vector.shape_cast %3 : vector<1x16x18x4xbf16> to vector<16x18x4xbf16>
    %5 = vector.extract_strided_slice %4 {offsets = [0, 0, 0], sizes = [16, 16, 4], strides = [1, 1, 1]} : vector<16x18x4xbf16> to vector<16x16x4xbf16>
    %6 = vector.shape_cast %5 : vector<16x16x4xbf16> to vector<256x4xbf16>
    %7 = vector.extract_strided_slice %4 {offsets = [0, 1, 0], sizes = [16, 16, 4], strides = [1, 1, 1]} : vector<16x18x4xbf16> to vector<16x16x4xbf16>
    %8 = vector.shape_cast %7 : vector<16x16x4xbf16> to vector<256x4xbf16>
    %9 = vector.extract_strided_slice %4 {offsets = [0, 2, 0], sizes = [16, 16, 4], strides = [1, 1, 1]} : vector<16x18x4xbf16> to vector<16x16x4xbf16>
    %10 = vector.shape_cast %9 : vector<16x16x4xbf16> to vector<256x4xbf16>
    %c1_i32 = arith.constant 1 : i32
    %11 = arith.addi %0, %c1_i32 : i32
    %c0_2 = arith.constant 0 : index
    %12 = arith.index_cast %11 : i32 to index
    %c0_3 = arith.constant 0 : index
    %c0_4 = arith.constant 0 : index
    %13 = vector.load %arg2[%c0_2, %12, %c0_3, %c0_4] : memref<1x18x18x4xbf16, #tpu.memory_space<vmem>>, vector<1x16x18x4xbf16>
    %14 = vector.shape_cast %13 : vector<1x16x18x4xbf16> to vector<16x18x4xbf16>
    %15 = vector.extract_strided_slice %14 {offsets = [0, 0, 0], sizes = [16, 16, 4], strides = [1, 1, 1]} : vector<16x18x4xbf16> to vector<16x16x4xbf16>
    %16 = vector.shape_cast %15 : vector<16x16x4xbf16> to vector<256x4xbf16>
    %17 = vector.extract_strided_slice %14 {offsets = [0, 1, 0], sizes = [16, 16, 4], strides = [1, 1, 1]} : vector<16x18x4xbf16> to vector<16x16x4xbf16>
    %18 = vector.shape_cast %17 : vector<16x16x4xbf16> to vector<256x4xbf16>
    %19 = vector.extract_strided_slice %14 {offsets = [0, 2, 0], sizes = [16, 16, 4], strides = [1, 1, 1]} : vector<16x18x4xbf16> to vector<16x16x4xbf16>
    %20 = vector.shape_cast %19 : vector<16x16x4xbf16> to vector<256x4xbf16>
    %c2_i32 = arith.constant 2 : i32
    %21 = arith.addi %0, %c2_i32 : i32
    %c0_5 = arith.constant 0 : index
    %22 = arith.index_cast %21 : i32 to index
    %c0_6 = arith.constant 0 : index
    %c0_7 = arith.constant 0 : index
    %23 = vector.load %arg2[%c0_5, %22, %c0_6, %c0_7] : memref<1x18x18x4xbf16, #tpu.memory_space<vmem>>, vector<1x16x18x4xbf16>
    %24 = vector.shape_cast %23 : vector<1x16x18x4xbf16> to vector<16x18x4xbf16>
    %25 = vector.extract_strided_slice %24 {offsets = [0, 0, 0], sizes = [16, 16, 4], strides = [1, 1, 1]} : vector<16x18x4xbf16> to vector<16x16x4xbf16>
    %26 = vector.shape_cast %25 : vector<16x16x4xbf16> to vector<256x4xbf16>
    %27 = vector.extract_strided_slice %24 {offsets = [0, 1, 0], sizes = [16, 16, 4], strides = [1, 1, 1]} : vector<16x18x4xbf16> to vector<16x16x4xbf16>
    %28 = vector.shape_cast %27 : vector<16x16x4xbf16> to vector<256x4xbf16>
    %29 = vector.extract_strided_slice %24 {offsets = [0, 2, 0], sizes = [16, 16, 4], strides = [1, 1, 1]} : vector<16x18x4xbf16> to vector<16x16x4xbf16>
    %30 = vector.shape_cast %29 : vector<16x16x4xbf16> to vector<256x4xbf16>
    %31 = tpu.concatenate %6, %8, %10, %16, %18, %20, %26, %28, %30 in 1 : vector<256x4xbf16>, vector<256x4xbf16>, vector<256x4xbf16>, vector<256x4xbf16>, vector<256x4xbf16>, vector<256x4xbf16>, vector<256x4xbf16>, vector<256x4xbf16>, vector<256x4xbf16> -> vector<256x36xbf16>
    %c0_8 = arith.constant 0 : index
    %c0_9 = arith.constant 0 : index
    %32 = vector.load %arg3[%c0_8, %c0_9] : memref<8x36xbf16, #tpu.memory_space<vmem>>, vector<8x36xbf16>
    %cst = arith.constant dense<0.000000e+00> : vector<8x256xf32>
    %33 = tpu.matmul %32, %31, %cst {dimension_numbers = #tpu.dot_dimension_numbers<[1], [1], [0], [0], [0, 0, 1, 0], [], []>} : vector<8x36xbf16>, vector<256x36xbf16>, vector<8x256xf32> -> vector<8x256xf32>
    %c0_10 = arith.constant 0 : index
    %c0_11 = arith.constant 0 : index
    %34 = vector.load %arg4[%c0_10, %c0_11] : memref<8x1xf32, #tpu.memory_space<vmem>>, vector<8x1xf32>
    %35 = vector.broadcast %34 : vector<8x1xf32> to vector<8x256xf32>
    %36 = arith.addf %33, %35 : vector<8x256xf32>
    %c0_12 = arith.constant 0 : index
    %c0_13 = arith.constant 0 : index
    %c0_14 = arith.constant 0 : index
    %37 = vector.load %arg5[%c0_12, %c0_13, %c0_14] : memref<1x8x256xf32, #tpu.memory_space<vmem>>, vector<1x8x256xf32>
    %38 = vector.shape_cast %37 : vector<1x8x256xf32> to vector<8x256xf32>
    %39 = vector.shape_cast %36 : vector<8x256xf32> to vector<1x8x256xf32>
    tpu.vector_store %arg5[%c0_12, %c0_13, %c0_14], %39 {strides = array<i32>} : memref<1x8x256xf32, #tpu.memory_space<vmem>>, vector<1x8x256xf32>,
    return
  }
  func.func @transform_0(%arg0: i32, %arg1: i32) -> (i32, i32, i32, i32) {
    %c0_i32 = arith.constant 0 : i32
    %c0_i32_0 = arith.constant 0 : i32
    %c0_i32_1 = arith.constant 0 : i32
    %c0_i32_2 = arith.constant 0 : i32
    return %arg0, %c0_i32, %c0_i32_0, %c0_i32_1 : i32, i32, i32, i32
  }
  func.func @transform_1(%arg0: i32, %arg1: i32) -> (i32, i32) {
    %c0_i32 = arith.constant 0 : i32
    %c0_i32_0 = arith.constant 0 : i32
    %c0_i32_1 = arith.constant 0 : i32
    return %c0_i32, %c0_i32_0 : i32, i32
  }
  func.func @transform_2(%arg0: i32, %arg1: i32) -> (i32, i32) {
    %c0_i32 = arith.constant 0 : i32
    %c0_i32_0 = arith.constant 0 : i32
    %c0_i32_1 = arith.constant 0 : i32
    return %c0_i32, %c0_i32_0 : i32, i32
  }
  func.func @transform_3(%arg0: i32, %arg1: i32) -> (i32, i32, i32) {
    %c0_i32 = arith.constant 0 : i32
    %c0_i32_0 = arith.constant 0 : i32
    return %arg0, %c0_i32, %arg1 : i32, i32, i32
  }
}

</mosaic_0001>

<llo_original>
// kernel: conv_layer_forward.1
$region0: #{conv_layer_forward.1}
  #allocation0 [shape = 'u32[]', space=smem, size = 0x4, offset = 0x4, fixed_abs, tag = 'smem constant byte address 0x4 - core index']
  #allocation1 [shape = 'u32[144,128]{1,0:T(1,128)}', space=vmem, size = 0x12000, scoped, tag = 'internal scratch']
  %s0 = inlined_call_operand.vmem [shape: bf16[2,18,18,4], index: 0, kind: input, shape index: {}]
  %s1 = inlined_call_operand.vmem [shape: bf16[8,36], index: 1, kind: input, shape index: {}]
  %s2 = inlined_call_operand.vmem [shape: f32[8,1], index: 2, kind: input, shape index: {}]
  %s3 = inlined_call_operand.vmem [shape: f32[2,8,256], index: 3, kind: output, shape index: {}]
  %s4 = sld [smem:[#allocation0]]
  $region45: #{conv_layer_forward.1} parent=0
    _
  %s6 = ssub.s32 1, %s4
  %s7 = scalar_select 0, %s6, %s4
  loop: start=0, step=1, limit=4
  $region2: #{conv_layer_forward.1} parent=0 // loop_pre_header
    _
  $region3: #{conv_layer_forward.1} parent=0 // loop_header
    %s9 = sphi 0, %s13
    %p10 = scmp.ge.s32.totalorder %s9, 4
    %s16 = sphi 0, %s28
    %s17 = sphi 0, %s24
    %s18 = sphi 0, %s16
    %s19 = sphi 0, %s17
    %s20 = sphi 0, %s18
    %s21 = sphi 0, %s19
    %s31 = sphi 0, %s33
    %s34 = sphi 0, %s31
    %s35 = sphi 0, %s34
    %s51 = sphi 0, %s35
    %s55 = sphi 0, %s55
    %s57 = sphi 0, %s55
    %s58 = sphi 0, %s57
    %s72 = sphi 0, %s58
    %s76 = sphi 0, %s76
    %s78 = sphi 0, %s76
    %s79 = sphi 0, %s78
    %s93 = sphi 0, %s79
    %s101 = sphi 0, %s103
    %s104 = sphi 0, %s101
    %s105 = sphi 0, %s104
    %s121 = sphi 0, %s105
  $region4: #{conv_layer_forward.1} parent=0 // loop_header_branch
    %12 = sbr.rel (%p10) target = $region8
  $region5: #{conv_layer_forward.1} parent=0 // loop_body
    %s14 = ssub.s32 %s9, 1
    %s15 = ssub.s32 %s9, 2
    %s22 = sadd.s32 1, %s17
    %p23 = scmp.ge.s32.totalorder %s22, 1
    %s24 = scalar_select %p23, 0, %s22
    %s25 = sadd.s32 1, %s16
    %s26 = scalar_select %p23, %s25, %s16
    %p27 = scmp.ge.s32.totalorder %s26, 2
    %s28 = scalar_select %p27, 0, %s26
    %s29 = ssub.s32 %s16, %s28
    %p30 = scmp.eq.s32.totalorder %s29, 0
    %s32 = sadd.s32 %s31, 1
    %s33 = scalar_select %p30, %s31, %s32
    %p36 = pneg %p30
    %p37 = scmp.eq.s32.totalorder %s9, 1
    %p38 = por %p36, %p37
    %p39 = scmp.ne.s32.totalorder %s31, %s34
    %p40 = scmp.eq.s32.totalorder %s9, 0
    %p41 = por %p39, %p40
    %p42 = scmp.ne.s32.totalorder %s31, %s34
    %p43 = scmp.eq.s32.totalorder %s14, 1
    %p44 = por %p42, %p43
    %p45 = scmp.ne.s32.totalorder %s34, %s35
    %p46 = scmp.eq.s32.totalorder %s14, 0
    %p47 = por %p45, %p46
    %p48 = scmp.ne.s32.totalorder %s34, %s35
    %p49 = scmp.eq.s32.totalorder %s15, 1
    %p50 = por %p48, %p49
    %p52 = scmp.ne.s32.totalorder %s35, %s51
    %p53 = scmp.eq.s32.totalorder %s15, 0
    %p54 = por %p52, %p53
    %s56 = sadd.s32 %s55, 1
    %p59 = scmp.eq.s32.totalorder %s9, 1
    %p60 = scmp.ne.s32.totalorder %s55, %s57
    %p61 = scmp.eq.s32.totalorder %s9, 0
    %p62 = por %p60, %p61
    %p63 = scmp.ne.s32.totalorder %s55, %s57
    %p64 = scmp.eq.s32.totalorder %s14, 1
    %p65 = por %p63, %p64
    %p66 = scmp.ne.s32.totalorder %s57, %s58
    %p67 = scmp.eq.s32.totalorder %s14, 0
    %p68 = por %p66, %p67
    %p69 = scmp.ne.s32.totalorder %s57, %s58
    %p70 = scmp.eq.s32.totalorder %s15, 1
    %p71 = por %p69, %p70
    %p73 = scmp.ne.s32.totalorder %s58, %s72
    %p74 = scmp.eq.s32.totalorder %s15, 0
    %p75 = por %p73, %p74
    %s77 = sadd.s32 %s76, 1
    %p80 = scmp.eq.s32.totalorder %s9, 1
    %p81 = scmp.ne.s32.totalorder %s76, %s78
    %p82 = scmp.eq.s32.totalorder %s9, 0
    %p83 = por %p81, %p82
    %p84 = scmp.ne.s32.totalorder %s76, %s78
    %p85 = scmp.eq.s32.totalorder %s14, 1
    %p86 = por %p84, %p85
    %p87 = scmp.ne.s32.totalorder %s78, %s79
    %p88 = scmp.eq.s32.totalorder %s14, 0
    %p89 = por %p87, %p88
    %p90 = scmp.ne.s32.totalorder %s78, %s79
    %p91 = scmp.eq.s32.totalorder %s15, 1
    %p92 = por %p90, %p91
    %p94 = scmp.ne.s32.totalorder %s79, %s93
    %p95 = scmp.eq.s32.totalorder %s15, 0
    %p96 = por %p94, %p95
    %s97 = ssub.s32 %s16, %s28
    %s98 = ssub.s32 %s17, %s24
    %s99 = sor.u32 %s97, %s98
    %p100 = scmp.eq.s32.totalorder %s99, 0
    %s102 = sadd.s32 %s101, 1
    %s103 = scalar_select %p100, %s101, %s102
    %p106 = pneg %p100
    %p107 = scmp.eq.s32.totalorder %s9, 1
    %p108 = por %p106, %p107
    %p109 = scmp.ne.s32.totalorder %s101, %s104
    %p110 = scmp.eq.s32.totalorder %s9, 0
    %p111 = por %p109, %p110
    %p112 = scmp.ne.s32.totalorder %s101, %s104
    %p113 = scmp.eq.s32.totalorder %s14, 1
    %p114 = por %p112, %p113
    %p115 = scmp.ne.s32.totalorder %s104, %s105
    %p116 = scmp.eq.s32.totalorder %s14, 0
    %p117 = por %p115, %p116
    %p118 = scmp.ne.s32.totalorder %s104, %s105
    %p119 = scmp.eq.s32.totalorder %s15, 1
    %p120 = por %p118, %p119
    %p122 = scmp.ne.s32.totalorder %s105, %s121
    %p123 = scmp.eq.s32.totalorder %s15, 0
    %p124 = por %p122, %p123
    %p125 = scmp.le.s32.totalorder 1, %s9
    %p126 = scmp.lt.s32.totalorder %s9, 3
    %p127 = pnand %p125, %p126
    %p128 = pneg %p127
    // Predicated region
    $region9: #{conv_layer_forward.1} parent=5 // pred_check
      _
    $region10: #{conv_layer_forward.1} parent=5 // pred_check_branch
      %130 = sbr.rel (%p127) target = $region12
    $region11: #{conv_layer_forward.1} parent=5 // pred_region
      %s131 = ssub.s32 %s9, 1
      // Predicated region
      $region13: #{conv_layer_forward.1} parent=11 // pred_check
        %p132 = pneg %p68
      $region14: #{conv_layer_forward.1} parent=11 // pred_check_branch
        %134 = sbr.rel (%p132) target = $region16
      $region15: #{conv_layer_forward.1} parent=11 // pred_region
        _
      $region16: #{conv_layer_forward.1} parent=11 // pred_fallthru
        _
      // Predicated region
      $region17: #{conv_layer_forward.1} parent=11 // pred_check
        %p135 = pneg %p89
      $region18: #{conv_layer_forward.1} parent=11 // pred_check_branch
        %137 = sbr.rel (%p135) target = $region20
      $region19: #{conv_layer_forward.1} parent=11 // pred_region
        _
      $region20: #{conv_layer_forward.1} parent=11 // pred_fallthru
        _
    $region12: #{conv_layer_forward.1} parent=5 // pred_fallthru
      _
    %p138 = scmp.lt.s32.totalorder %s9, 2
    // Predicated region
    $region21: #{conv_layer_forward.1} parent=5 // pred_check
      %p139 = pneg %p138
    $region22: #{conv_layer_forward.1} parent=5 // pred_check_branch
      %141 = sbr.rel (%p139) target = $region24
    $region23: #{conv_layer_forward.1} parent=5 // pred_region
      // Predicated region
      $region25: #{conv_layer_forward.1} parent=23 // pred_check
        %p142 = pneg %p41
      $region26: #{conv_layer_forward.1} parent=23 // pred_check_branch
        %144 = sbr.rel (%p142) target = $region28
      $region27: #{conv_layer_forward.1} parent=23 // pred_region
        %p145 = scmp.lt.s32.totalorder %s16, 1
        %s146 = scalar_select %p145, %s16, 1
        %s147 = smul.addr %s146, 54
        %s148 = smul.addr %s147, 4
        %s149 = scalar_lea.vmem %s0, %s148
      $region28: #{conv_layer_forward.1} parent=23 // pred_fallthru
        _
    $region24: #{conv_layer_forward.1} parent=5 // pred_fallthru
      _
    %p150 = scmp.le.s32.totalorder 1, %s9
    %p151 = scmp.lt.s32.totalorder %s9, 3
    %p152 = pnand %p150, %p151
    %p153 = pneg %p152
    // Predicated region
    $region29: #{conv_layer_forward.1} parent=5 // pred_check
      _
    $region30: #{conv_layer_forward.1} parent=5 // pred_check_branch
      %155 = sbr.rel (%p152) target = $region32
    $region31: #{conv_layer_forward.1} parent=5 // pred_region
      %s156 = ssub.s32 %s9, 1
      %p157 = scmp.lt.s32.totalorder %s18, 1
      %s158 = scalar_select %p157, %s18, 1
      %s159 = smul.addr %s158, 54
      %s160 = smul.addr %s159, 4
      %s161 = scalar_lea.vmem %s0, %s160
      %p162 = pneg %p47
      %p163 = pneg %p44
      %p164 = pneg %p68
      %p165 = pneg %p65
      %p166 = pneg %p89
      %p167 = pneg %p86
      %p168 = pneg %p117
      %p169 = pneg %p114
      %s170 = smul.u32 2, %s19
      %p171 = scmp.lt.s32.totalorder %s18, 1
      %s172 = scalar_select %p171, %s18, 1
      %p173 = scmp.lt.s32.totalorder %s170, 1
      %s174 = scalar_select %p173, %s170, 1
      %s175 = smul.addr %s172, 2
      %s176 = sadd.s32 %s174, %s175
      %s177 = smul.addr %s176, 8
      %s178 = scalar_lea.vmem %s3, %s177
      %p179 = scmp.lt.s32.totalorder %s18, 1
      %s180 = scalar_select %p179, %s18, 1
      %s181 = smul.addr %s180, 54
      %s182 = smul.addr %s181, 4
      %s183 = scalar_lea.vmem %s0, %s182
      %s184 = smul.u32 2, %s19
      %p185 = scmp.lt.s32.totalorder %s18, 1
      %s186 = scalar_select %p185, %s18, 1
      %p187 = scmp.lt.s32.totalorder %s184, 1
      %s188 = scalar_select %p187, %s184, 1
      %s189 = smul.addr %s186, 2
      %s190 = sadd.s32 %s188, %s189
      %s191 = smul.addr %s190, 8
      %s192 = scalar_lea.vmem %s3, %s191
      %s193 = smul.u32 2, %s19
      %s195 = smul.u32 %s19, 16
      %s196 = smul.u32 %s195, 3
      %s197 = smul.addr %s196, 4
      %s198 = scalar_lea.vmem %s183, %s197
      %v199 = vld [vmem:[%s198] sm:$0xf]
      %v200 = vld [vmem:[%s198 + $0x4] sm:$0xf]
      %v201 = vld [vmem:[%s198 + $0x8] sm:$0x1]
      %v202 = vld [vmem:[%s198 + $0xc] sm:$0xf]
      %v203 = vld [vmem:[%s198 + $0x10] sm:$0xf]
      %v204 = vld [vmem:[%s198 + $0x14] sm:$0x1]
      %v205 = vld [vmem:[%s198 + $0x18] sm:$0xf]
      %v206 = vld [vmem:[%s198 + $0x1c] sm:$0xf]
      %v207 = vld [vmem:[%s198 + $0x20] sm:$0x1]
      %v208 = vld [vmem:[%s198 + $0x24] sm:$0xf]
      %v209 = vld [vmem:[%s198 + $0x28] sm:$0xf]
      %v210 = vld [vmem:[%s198 + $0x2c] sm:$0x1]
      %v211 = vld [vmem:[%s198 + $0x30] sm:$0xf]
      %v212 = vld [vmem:[%s198 + $0x34] sm:$0xf]
      %v213 = vld [vmem:[%s198 + $0x38] sm:$0x1]
      %v214 = vld [vmem:[%s198 + $0x3c] sm:$0xf]
      %v215 = vld [vmem:[%s198 + $0x40] sm:$0xf]
      %v216 = vld [vmem:[%s198 + $0x44] sm:$0x1]
      %v217 = vld [vmem:[%s198 + $0x48] sm:$0xf]
      %v218 = vld [vmem:[%s198 + $0x4c] sm:$0xf]
      %v219 = vld [vmem:[%s198 + $0x50] sm:$0x1]
      %v220 = vld [vmem:[%s198 + $0x54] sm:$0xf]
      %v221 = vld [vmem:[%s198 + $0x58] sm:$0xf]
      %v222 = vld [vmem:[%s198 + $0x5c] sm:$0x1]
      %v223 = vld [vmem:[%s198 + $0x60] sm:$0xf]
      %v224 = vld [vmem:[%s198 + $0x64] sm:$0xf]
      %v225 = vld [vmem:[%s198 + $0x68] sm:$0x1]
      %v226 = vld [vmem:[%s198 + $0x6c] sm:$0xf]
      %v227 = vld [vmem:[%s198 + $0x70] sm:$0xf]
      %v228 = vld [vmem:[%s198 + $0x74] sm:$0x1]
      %v229 = vld [vmem:[%s198 + $0x78] sm:$0xf]
      %v230 = vld [vmem:[%s198 + $0x7c] sm:$0xf]
      %v231 = vld [vmem:[%s198 + $0x80] sm:$0x1]
      %v232 = vld [vmem:[%s198 + $0x84] sm:$0xf]
      %v233 = vld [vmem:[%s198 + $0x88] sm:$0xf]
      %v234 = vld [vmem:[%s198 + $0x8c] sm:$0x1]
      %v235 = vld [vmem:[%s198 + $0x90] sm:$0xf]
      %v236 = vld [vmem:[%s198 + $0x94] sm:$0xf]
      %v237 = vld [vmem:[%s198 + $0x98] sm:$0x1]
      %v238 = vld [vmem:[%s198 + $0x9c] sm:$0xf]
      %v239 = vld [vmem:[%s198 + $0xa0] sm:$0xf]
      %v240 = vld [vmem:[%s198 + $0xa4] sm:$0x1]
      %v241 = vld [vmem:[%s198 + $0xa8] sm:$0xf]
      %v242 = vld [vmem:[%s198 + $0xac] sm:$0xf]
      %v243 = vld [vmem:[%s198 + $0xb0] sm:$0x1]
      %v244 = vld [vmem:[%s198 + $0xb4] sm:$0xf]
      %v245 = vld [vmem:[%s198 + $0xb8] sm:$0xf]
      %v246 = vld [vmem:[%s198 + $0xbc] sm:$0x1]
      %vm247 = vsmask.f32 3328
      %vm248 = vsmask.f32 7440
      %vm249 = vmor %vm247, %vm248
      %v251 = vshrl.u32 %v199, 16
      %v253 = vrot.slane %v251, 4
      %v254 = vshll.u32 %v199, 16
      %v256 = vrot.slane %v254, 5
      %v257 = vor.u32 %v253, %v256
      %v258 = vrot.slane %v257, 4
      %v260 = vshll.u32 %v200, 16
      %v262 = vrot.slane %v260, 5
      %v263 = vsel %vm249, %v258, %v262
      %v264 = vshrl.u32 %v200, 16
      %v266 = vrot.slane %v264, 4
      %v267 = vor.u32 %v266, %v262
      %v268 = vrot.slane %v267, 4
      %v270 = vshll.u32 %v201, 16
      %v272 = vrot.slane %v270, 5
      %v273 = vsel %vm249, %v268, %v272
      %v275 = vshrl.u32 %v202, 16
      %v277 = vrot.slane %v275, 4
      %v278 = vshll.u32 %v202, 16
      %v280 = vrot.slane %v278, 5
      %v281 = vor.u32 %v277, %v280
      %v282 = vrot.slane %v281, 4
      %v284 = vshll.u32 %v203, 16
      %v286 = vrot.slane %v284, 5
      %v287 = vsel %vm249, %v282, %v286
      %v288 = vshrl.u32 %v203, 16
      %v290 = vrot.slane %v288, 4
      %v291 = vor.u32 %v290, %v286
      %v292 = vrot.slane %v291, 4
      %v294 = vshll.u32 %v204, 16
      %v296 = vrot.slane %v294, 5
      %v297 = vsel %vm249, %v292, %v296
      %v299 = vshrl.u32 %v205, 16
      %v301 = vrot.slane %v299, 4
      %v302 = vshll.u32 %v205, 16
      %v304 = vrot.slane %v302, 5
      %v305 = vor.u32 %v301, %v304
      %v306 = vrot.slane %v305, 4
      %v308 = vshll.u32 %v206, 16
      %v310 = vrot.slane %v308, 5
      %v311 = vsel %vm249, %v306, %v310
      %v312 = vshrl.u32 %v206, 16
      %v314 = vrot.slane %v312, 4
      %v315 = vor.u32 %v314, %v310
      %v316 = vrot.slane %v315, 4
      %v318 = vshll.u32 %v207, 16
      %v320 = vrot.slane %v318, 5
      %v321 = vsel %vm249, %v316, %v320
      %v323 = vshrl.u32 %v208, 16
      %v325 = vrot.slane %v323, 4
      %v326 = vshll.u32 %v208, 16
      %v328 = vrot.slane %v326, 5
      %v329 = vor.u32 %v325, %v328
      %v330 = vrot.slane %v329, 4
      %v332 = vshll.u32 %v209, 16
      %v334 = vrot.slane %v332, 5
      %v335 = vsel %vm249, %v330, %v334
      %v336 = vshrl.u32 %v209, 16
      %v338 = vrot.slane %v336, 4
      %v339 = vor.u32 %v338, %v334
      %v340 = vrot.slane %v339, 4
      %v342 = vshll.u32 %v210, 16
      %v344 = vrot.slane %v342, 5
      %v345 = vsel %vm249, %v340, %v344
      %v347 = vshrl.u32 %v211, 16
      %v349 = vrot.slane %v347, 4
      %v350 = vshll.u32 %v211, 16
      %v352 = vrot.slane %v350, 5
      %v353 = vor.u32 %v349, %v352
      %v354 = vrot.slane %v353, 4
      %v356 = vshll.u32 %v212, 16
      %v358 = vrot.slane %v356, 5
      %v359 = vsel %vm249, %v354, %v358
      %v360 = vshrl.u32 %v212, 16
      %v362 = vrot.slane %v360, 4
      %v363 = vor.u32 %v362, %v358
      %v364 = vrot.slane %v363, 4
      %v366 = vshll.u32 %v213, 16
      %v368 = vrot.slane %v366, 5
      %v369 = vsel %vm249, %v364, %v368
      %v371 = vshrl.u32 %v214, 16
      %v373 = vrot.slane %v371, 4
      %v374 = vshll.u32 %v214, 16
      %v376 = vrot.slane %v374, 5
      %v377 = vor.u32 %v373, %v376
      %v378 = vrot.slane %v377, 4
      %v380 = vshll.u32 %v215, 16
      %v382 = vrot.slane %v380, 5
      %v383 = vsel %vm249, %v378, %v382
      %v384 = vshrl.u32 %v215, 16
      %v386 = vrot.slane %v384, 4
      %v387 = vor.u32 %v386, %v382
      %v388 = vrot.slane %v387, 4
      %v390 = vshll.u32 %v216, 16
      %v392 = vrot.slane %v390, 5
      %v393 = vsel %vm249, %v388, %v392
      %v395 = vshrl.u32 %v217, 16
      %v397 = vrot.slane %v395, 4
      %v398 = vshll.u32 %v217, 16
      %v400 = vrot.slane %v398, 5
      %v401 = vor.u32 %v397, %v400
      %v402 = vrot.slane %v401, 4
      %v404 = vshll.u32 %v218, 16
      %v406 = vrot.slane %v404, 5
      %v407 = vsel %vm249, %v402, %v406
      %v408 = vshrl.u32 %v218, 16
      %v410 = vrot.slane %v408, 4
      %v411 = vor.u32 %v410, %v406
      %v412 = vrot.slane %v411, 4
      %v414 = vshll.u32 %v219, 16
      %v416 = vrot.slane %v414, 5
      %v417 = vsel %vm249, %v412, %v416
      %v419 = vshrl.u32 %v220, 16
      %v421 = vrot.slane %v419, 4
      %v422 = vshll.u32 %v220, 16
      %v424 = vrot.slane %v422, 5
      %v425 = vor.u32 %v421, %v424
      %v426 = vrot.slane %v425, 4
      %v428 = vshll.u32 %v221, 16
      %v430 = vrot.slane %v428, 5
      %v431 = vsel %vm249, %v426, %v430
      %v432 = vshrl.u32 %v221, 16
      %v434 = vrot.slane %v432, 4
      %v435 = vor.u32 %v434, %v430
      %v436 = vrot.slane %v435, 4
      %v438 = vshll.u32 %v222, 16
      %v440 = vrot.slane %v438, 5
      %v441 = vsel %vm249, %v436, %v440
      %v443 = vshrl.u32 %v223, 16
      %v445 = vrot.slane %v443, 4
      %v446 = vshll.u32 %v223, 16
      %v448 = vrot.slane %v446, 5
      %v449 = vor.u32 %v445, %v448
      %v450 = vrot.slane %v449, 4
      %v452 = vshll.u32 %v224, 16
      %v454 = vrot.slane %v452, 5
      %v455 = vsel %vm249, %v450, %v454
      %v456 = vshrl.u32 %v224, 16
      %v458 = vrot.slane %v456, 4
      %v459 = vor.u32 %v458, %v454
      %v460 = vrot.slane %v459, 4
      %v462 = vshll.u32 %v225, 16
      %v464 = vrot.slane %v462, 5
      %v465 = vsel %vm249, %v460, %v464
      %v467 = vshrl.u32 %v226, 16
      %v469 = vrot.slane %v467, 4
      %v470 = vshll.u32 %v226, 16
      %v472 = vrot.slane %v470, 5
      %v473 = vor.u32 %v469, %v472
      %v474 = vrot.slane %v473, 4
      %v476 = vshll.u32 %v227, 16
      %v478 = vrot.slane %v476, 5
      %v479 = vsel %vm249, %v474, %v478
      %v480 = vshrl.u32 %v227, 16
      %v482 = vrot.slane %v480, 4
      %v483 = vor.u32 %v482, %v478
      %v484 = vrot.slane %v483, 4
      %v486 = vshll.u32 %v228, 16
      %v488 = vrot.slane %v486, 5
      %v489 = vsel %vm249, %v484, %v488
      %v491 = vshrl.u32 %v229, 16
      %v493 = vrot.slane %v491, 4
      %v494 = vshll.u32 %v229, 16
      %v496 = vrot.slane %v494, 5
      %v497 = vor.u32 %v493, %v496
      %v498 = vrot.slane %v497, 4
      %v500 = vshll.u32 %v230, 16
      %v502 = vrot.slane %v500, 5
      %v503 = vsel %vm249, %v498, %v502
      %v504 = vshrl.u32 %v230, 16
      %v506 = vrot.slane %v504, 4
      %v507 = vor.u32 %v506, %v502
      %v508 = vrot.slane %v507, 4
      %v510 = vshll.u32 %v231, 16
      %v512 = vrot.slane %v510, 5
      %v513 = vsel %vm249, %v508, %v512
      %v515 = vshrl.u32 %v232, 16
      %v517 = vrot.slane %v515, 4
      %v518 = vshll.u32 %v232, 16
      %v520 = vrot.slane %v518, 5
      %v521 = vor.u32 %v517, %v520
      %v522 = vrot.slane %v521, 4
      %v524 = vshll.u32 %v233, 16
      %v526 = vrot.slane %v524, 5
      %v527 = vsel %vm249, %v522, %v526
      %v528 = vshrl.u32 %v233, 16
      %v530 = vrot.slane %v528, 4
      %v531 = vor.u32 %v530, %v526
      %v532 = vrot.slane %v531, 4
      %v534 = vshll.u32 %v234, 16
      %v536 = vrot.slane %v534, 5
      %v537 = vsel %vm249, %v532, %v536
      %v539 = vshrl.u32 %v235, 16
      %v541 = vrot.slane %v539, 4
      %v542 = vshll.u32 %v235, 16
      %v544 = vrot.slane %v542, 5
      %v545 = vor.u32 %v541, %v544
      %v546 = vrot.slane %v545, 4
      %v548 = vshll.u32 %v236, 16
      %v550 = vrot.slane %v548, 5
      %v551 = vsel %vm249, %v546, %v550
      %v552 = vshrl.u32 %v236, 16
      %v554 = vrot.slane %v552, 4
      %v555 = vor.u32 %v554, %v550
      %v556 = vrot.slane %v555, 4
      %v558 = vshll.u32 %v237, 16
      %v560 = vrot.slane %v558, 5
      %v561 = vsel %vm249, %v556, %v560
      %v563 = vshrl.u32 %v238, 16
      %v565 = vrot.slane %v563, 4
      %v566 = vshll.u32 %v238, 16
      %v568 = vrot.slane %v566, 5
      %v569 = vor.u32 %v565, %v568
      %v570 = vrot.slane %v569, 4
      %v572 = vshll.u32 %v239, 16
      %v574 = vrot.slane %v572, 5
      %v575 = vsel %vm249, %v570, %v574
      %v576 = vshrl.u32 %v239, 16
      %v578 = vrot.slane %v576, 4
      %v579 = vor.u32 %v578, %v574
      %v580 = vrot.slane %v579, 4
      %v582 = vshll.u32 %v240, 16
      %v584 = vrot.slane %v582, 5
      %v585 = vsel %vm249, %v580, %v584
      %v587 = vshrl.u32 %v241, 16
      %v589 = vrot.slane %v587, 4
      %v590 = vshll.u32 %v241, 16
      %v592 = vrot.slane %v590, 5
      %v593 = vor.u32 %v589, %v592
      %v594 = vrot.slane %v593, 4
      %v596 = vshll.u32 %v242, 16
      %v598 = vrot.slane %v596, 5
      %v599 = vsel %vm249, %v594, %v598
      %v600 = vshrl.u32 %v242, 16
      %v602 = vrot.slane %v600, 4
      %v603 = vor.u32 %v602, %v598
      %v604 = vrot.slane %v603, 4
      %v606 = vshll.u32 %v243, 16
      %v608 = vrot.slane %v606, 5
      %v609 = vsel %vm249, %v604, %v608
      %v611 = vshrl.u32 %v244, 16
      %v613 = vrot.slane %v611, 4
      %v614 = vshll.u32 %v244, 16
      %v616 = vrot.slane %v614, 5
      %v617 = vor.u32 %v613, %v616
      %v618 = vrot.slane %v617, 4
      %v620 = vshll.u32 %v245, 16
      %v622 = vrot.slane %v620, 5
      %v623 = vsel %vm249, %v618, %v622
      %v624 = vshrl.u32 %v245, 16
      %v626 = vrot.slane %v624, 4
      %v627 = vor.u32 %v626, %v622
      %v628 = vrot.slane %v627, 4
      %v630 = vshll.u32 %v246, 16
      %v632 = vrot.slane %v630, 5
      %v633 = vsel %vm249, %v628, %v632
      %vm682 = vcmask 1042432
      %vm683 = vcmask 1046532
      %vm684 = vmor %vm682, %vm683
      %v685 = vrot.slane %v199, 5
      %v686 = vrot.slane %v685, 4
      %v687 = vrot.slane %v200, 5
      %v688 = vsel %vm684, %v686, %v687
      %v689 = vrot.slane %v687, 4
      %v690 = vrot.slane %v201, 5
      %v691 = vsel %vm684, %v689, %v690
      %v692 = vrot.slane %v202, 5
      %v693 = vrot.slane %v692, 4
      %v694 = vrot.slane %v203, 5
      %v695 = vsel %vm684, %v693, %v694
      %v696 = vrot.slane %v694, 4
      %v697 = vrot.slane %v204, 5
      %v698 = vsel %vm684, %v696, %v697
      %v699 = vrot.slane %v205, 5
      %v700 = vrot.slane %v699, 4
      %v701 = vrot.slane %v206, 5
      %v702 = vsel %vm684, %v700, %v701
      %v703 = vrot.slane %v701, 4
      %v704 = vrot.slane %v207, 5
      %v705 = vsel %vm684, %v703, %v704
      %v706 = vrot.slane %v208, 5
      %v707 = vrot.slane %v706, 4
      %v708 = vrot.slane %v209, 5
      %v709 = vsel %vm684, %v707, %v708
      %v710 = vrot.slane %v708, 4
      %v711 = vrot.slane %v210, 5
      %v712 = vsel %vm684, %v710, %v711
      %v713 = vrot.slane %v211, 5
      %v714 = vrot.slane %v713, 4
      %v715 = vrot.slane %v212, 5
      %v716 = vsel %vm684, %v714, %v715
      %v717 = vrot.slane %v715, 4
      %v718 = vrot.slane %v213, 5
      %v719 = vsel %vm684, %v717, %v718
      %v720 = vrot.slane %v214, 5
      %v721 = vrot.slane %v720, 4
      %v722 = vrot.slane %v215, 5
      %v723 = vsel %vm684, %v721, %v722
      %v724 = vrot.slane %v722, 4
      %v725 = vrot.slane %v216, 5
      %v726 = vsel %vm684, %v724, %v725
      %v727 = vrot.slane %v217, 5
      %v728 = vrot.slane %v727, 4
      %v729 = vrot.slane %v218, 5
      %v730 = vsel %vm684, %v728, %v729
      %v731 = vrot.slane %v729, 4
      %v732 = vrot.slane %v219, 5
      %v733 = vsel %vm684, %v731, %v732
      %v734 = vrot.slane %v220, 5
      %v735 = vrot.slane %v734, 4
      %v736 = vrot.slane %v221, 5
      %v737 = vsel %vm684, %v735, %v736
      %v738 = vrot.slane %v736, 4
      %v739 = vrot.slane %v222, 5
      %v740 = vsel %vm684, %v738, %v739
      %v741 = vrot.slane %v223, 5
      %v742 = vrot.slane %v741, 4
      %v743 = vrot.slane %v224, 5
      %v744 = vsel %vm684, %v742, %v743
      %v745 = vrot.slane %v743, 4
      %v746 = vrot.slane %v225, 5
      %v747 = vsel %vm684, %v745, %v746
      %v748 = vrot.slane %v226, 5
      %v749 = vrot.slane %v748, 4
      %v750 = vrot.slane %v227, 5
      %v751 = vsel %vm684, %v749, %v750
      %v752 = vrot.slane %v750, 4
      %v753 = vrot.slane %v228, 5
      %v754 = vsel %vm684, %v752, %v753
      %v755 = vrot.slane %v229, 5
      %v756 = vrot.slane %v755, 4
      %v757 = vrot.slane %v230, 5
      %v758 = vsel %vm684, %v756, %v757
      %v759 = vrot.slane %v757, 4
      %v760 = vrot.slane %v231, 5
      %v761 = vsel %vm684, %v759, %v760
      %v762 = vrot.slane %v232, 5
      %v763 = vrot.slane %v762, 4
      %v764 = vrot.slane %v233, 5
      %v765 = vsel %vm684, %v763, %v764
      %v766 = vrot.slane %v764, 4
      %v767 = vrot.slane %v234, 5
      %v768 = vsel %vm684, %v766, %v767
      %v769 = vrot.slane %v235, 5
      %v770 = vrot.slane %v769, 4
      %v771 = vrot.slane %v236, 5
      %v772 = vsel %vm684, %v770, %v771
      %v773 = vrot.slane %v771, 4
      %v774 = vrot.slane %v237, 5
      %v775 = vsel %vm684, %v773, %v774
      %v776 = vrot.slane %v238, 5
      %v777 = vrot.slane %v776, 4
      %v778 = vrot.slane %v239, 5
      %v779 = vsel %vm684, %v777, %v778
      %v780 = vrot.slane %v778, 4
      %v781 = vrot.slane %v240, 5
      %v782 = vsel %vm684, %v780, %v781
      %v783 = vrot.slane %v241, 5
      %v784 = vrot.slane %v783, 4
      %v785 = vrot.slane %v242, 5
      %v786 = vsel %vm684, %v784, %v785
      %v787 = vrot.slane %v785, 4
      %v788 = vrot.slane %v243, 5
      %v789 = vsel %vm684, %v787, %v788
      %v790 = vrot.slane %v244, 5
      %v791 = vrot.slane %v790, 4
      %v792 = vrot.slane %v245, 5
      %v793 = vsel %vm684, %v791, %v792
      %v794 = vrot.slane %v792, 4
      %v795 = vrot.slane %v246, 5
      %v796 = vsel %vm684, %v794, %v795
      %s797 = sadd.s32 %s195, 1
      %s798 = smul.u32 %s797, 3
      %s799 = smul.addr %s798, 4
      %s800 = scalar_lea.vmem %s183, %s799
      %v801 = vld [vmem:[%s800] sm:$0xf]
      %v802 = vld [vmem:[%s800 + $0x4] sm:$0xf]
      %v803 = vld [vmem:[%s800 + $0x8] sm:$0x1]
      %v804 = vld [vmem:[%s800 + $0xc] sm:$0xf]
      %v805 = vld [vmem:[%s800 + $0x10] sm:$0xf]
      %v806 = vld [vmem:[%s800 + $0x14] sm:$0x1]
      %v807 = vld [vmem:[%s800 + $0x18] sm:$0xf]
      %v808 = vld [vmem:[%s800 + $0x1c] sm:$0xf]
      %v809 = vld [vmem:[%s800 + $0x20] sm:$0x1]
      %v810 = vld [vmem:[%s800 + $0x24] sm:$0xf]
      %v811 = vld [vmem:[%s800 + $0x28] sm:$0xf]
      %v812 = vld [vmem:[%s800 + $0x2c] sm:$0x1]
      %v813 = vld [vmem:[%s800 + $0x30] sm:$0xf]
      %v814 = vld [vmem:[%s800 + $0x34] sm:$0xf]
      %v815 = vld [vmem:[%s800 + $0x38] sm:$0x1]
      %v816 = vld [vmem:[%s800 + $0x3c] sm:$0xf]
      %v817 = vld [vmem:[%s800 + $0x40] sm:$0xf]
      %v818 = vld [vmem:[%s800 + $0x44] sm:$0x1]
      %v819 = vld [vmem:[%s800 + $0x48] sm:$0xf]
      %v820 = vld [vmem:[%s800 + $0x4c] sm:$0xf]
      %v821 = vld [vmem:[%s800 + $0x50] sm:$0x1]
      %v822 = vld [vmem:[%s800 + $0x54] sm:$0xf]
      %v823 = vld [vmem:[%s800 + $0x58] sm:$0xf]
      %v824 = vld [vmem:[%s800 + $0x5c] sm:$0x1]
      %v825 = vld [vmem:[%s800 + $0x60] sm:$0xf]
      %v826 = vld [vmem:[%s800 + $0x64] sm:$0xf]
      %v827 = vld [vmem:[%s800 + $0x68] sm:$0x1]
      %v828 = vld [vmem:[%s800 + $0x6c] sm:$0xf]
      %v829 = vld [vmem:[%s800 + $0x70] sm:$0xf]
      %v830 = vld [vmem:[%s800 + $0x74] sm:$0x1]
      %v831 = vld [vmem:[%s800 + $0x78] sm:$0xf]
      %v832 = vld [vmem:[%s800 + $0x7c] sm:$0xf]
      %v833 = vld [vmem:[%s800 + $0x80] sm:$0x1]
      %v834 = vld [vmem:[%s800 + $0x84] sm:$0xf]
      %v835 = vld [vmem:[%s800 + $0x88] sm:$0xf]
      %v836 = vld [vmem:[%s800 + $0x8c] sm:$0x1]
      %v837 = vld [vmem:[%s800 + $0x90] sm:$0xf]
      %v838 = vld [vmem:[%s800 + $0x94] sm:$0xf]
      %v839 = vld [vmem:[%s800 + $0x98] sm:$0x1]
      %v840 = vld [vmem:[%s800 + $0x9c] sm:$0xf]
      %v841 = vld [vmem:[%s800 + $0xa0] sm:$0xf]
      %v842 = vld [vmem:[%s800 + $0xa4] sm:$0x1]
      %v843 = vld [vmem:[%s800 + $0xa8] sm:$0xf]
      %v844 = vld [vmem:[%s800 + $0xac] sm:$0xf]
      %v845 = vld [vmem:[%s800 + $0xb0] sm:$0x1]
      %v846 = vld [vmem:[%s800 + $0xb4] sm:$0xf]
      %v847 = vld [vmem:[%s800 + $0xb8] sm:$0xf]
      %v848 = vld [vmem:[%s800 + $0xbc] sm:$0x1]
      %v850 = vshrl.u32 %v801, 16
      %v852 = vrot.slane %v850, 4
      %v853 = vshll.u32 %v801, 16
      %v855 = vrot.slane %v853, 5
      %v856 = vor.u32 %v852, %v855
      %v857 = vrot.slane %v856, 4
      %v859 = vshll.u32 %v802, 16
      %v861 = vrot.slane %v859, 5
      %v862 = vsel %vm249, %v857, %v861
      %v863 = vshrl.u32 %v802, 16
      %v865 = vrot.slane %v863, 4
      %v866 = vor.u32 %v865, %v861
      %v867 = vrot.slane %v866, 4
      %v869 = vshll.u32 %v803, 16
      %v871 = vrot.slane %v869, 5
      %v872 = vsel %vm249, %v867, %v871
      %v874 = vshrl.u32 %v804, 16
      %v876 = vrot.slane %v874, 4
      %v877 = vshll.u32 %v804, 16
      %v879 = vrot.slane %v877, 5
      %v880 = vor.u32 %v876, %v879
      %v881 = vrot.slane %v880, 4
      %v883 = vshll.u32 %v805, 16
      %v885 = vrot.slane %v883, 5
      %v886 = vsel %vm249, %v881, %v885
      %v887 = vshrl.u32 %v805, 16
      %v889 = vrot.slane %v887, 4
      %v890 = vor.u32 %v889, %v885
      %v891 = vrot.slane %v890, 4
      %v893 = vshll.u32 %v806, 16
      %v895 = vrot.slane %v893, 5
      %v896 = vsel %vm249, %v891, %v895
      %v898 = vshrl.u32 %v807, 16
      %v900 = vrot.slane %v898, 4
      %v901 = vshll.u32 %v807, 16
      %v903 = vrot.slane %v901, 5
      %v904 = vor.u32 %v900, %v903
      %v905 = vrot.slane %v904, 4
      %v907 = vshll.u32 %v808, 16
      %v909 = vrot.slane %v907, 5
      %v910 = vsel %vm249, %v905, %v909
      %v911 = vshrl.u32 %v808, 16
      %v913 = vrot.slane %v911, 4
      %v914 = vor.u32 %v913, %v909
      %v915 = vrot.slane %v914, 4
      %v917 = vshll.u32 %v809, 16
      %v919 = vrot.slane %v917, 5
      %v920 = vsel %vm249, %v915, %v919
      %v922 = vshrl.u32 %v810, 16
      %v924 = vrot.slane %v922, 4
      %v925 = vshll.u32 %v810, 16
      %v927 = vrot.slane %v925, 5
      %v928 = vor.u32 %v924, %v927
      %v929 = vrot.slane %v928, 4
      %v931 = vshll.u32 %v811, 16
      %v933 = vrot.slane %v931, 5
      %v934 = vsel %vm249, %v929, %v933
      %v935 = vshrl.u32 %v811, 16
      %v937 = vrot.slane %v935, 4
      %v938 = vor.u32 %v937, %v933
      %v939 = vrot.slane %v938, 4
      %v941 = vshll.u32 %v812, 16
      %v943 = vrot.slane %v941, 5
      %v944 = vsel %vm249, %v939, %v943
      %v946 = vshrl.u32 %v813, 16
      %v948 = vrot.slane %v946, 4
      %v949 = vshll.u32 %v813, 16
      %v951 = vrot.slane %v949, 5
      %v952 = vor.u32 %v948, %v951
      %v953 = vrot.slane %v952, 4
      %v955 = vshll.u32 %v814, 16
      %v957 = vrot.slane %v955, 5
      %v958 = vsel %vm249, %v953, %v957
      %v959 = vshrl.u32 %v814, 16
      %v961 = vrot.slane %v959, 4
      %v962 = vor.u32 %v961, %v957
      %v963 = vrot.slane %v962, 4
      %v965 = vshll.u32 %v815, 16
      %v967 = vrot.slane %v965, 5
      %v968 = vsel %vm249, %v963, %v967
      %v970 = vshrl.u32 %v816, 16
      %v972 = vrot.slane %v970, 4
      %v973 = vshll.u32 %v816, 16
      %v975 = vrot.slane %v973, 5
      %v976 = vor.u32 %v972, %v975
      %v977 = vrot.slane %v976, 4
      %v979 = vshll.u32 %v817, 16
      %v981 = vrot.slane %v979, 5
      %v982 = vsel %vm249, %v977, %v981
      %v983 = vshrl.u32 %v817, 16
      %v985 = vrot.slane %v983, 4
      %v986 = vor.u32 %v985, %v981
      %v987 = vrot.slane %v986, 4
      %v989 = vshll.u32 %v818, 16
      %v991 = vrot.slane %v989, 5
      %v992 = vsel %vm249, %v987, %v991
      %v994 = vshrl.u32 %v819, 16
      %v996 = vrot.slane %v994, 4
      %v997 = vshll.u32 %v819, 16
      %v999 = vrot.slane %v997, 5
      %v1000 = vor.u32 %v996, %v999
      %v1001 = vrot.slane %v1000, 4
      %v1003 = vshll.u32 %v820, 16
      %v1005 = vrot.slane %v1003, 5
      %v1006 = vsel %vm249, %v1001, %v1005
      %v1007 = vshrl.u32 %v820, 16
      %v1009 = vrot.slane %v1007, 4
      %v1010 = vor.u32 %v1009, %v1005
      %v1011 = vrot.slane %v1010, 4
      %v1013 = vshll.u32 %v821, 16
      %v1015 = vrot.slane %v1013, 5
      %v1016 = vsel %vm249, %v1011, %v1015
      %v1018 = vshrl.u32 %v822, 16
      %v1020 = vrot.slane %v1018, 4
      %v1021 = vshll.u32 %v822, 16
      %v1023 = vrot.slane %v1021, 5
      %v1024 = vor.u32 %v1020, %v1023
      %v1025 = vrot.slane %v1024, 4
      %v1027 = vshll.u32 %v823, 16
      %v1029 = vrot.slane %v1027, 5
      %v1030 = vsel %vm249, %v1025, %v1029
      %v1031 = vshrl.u32 %v823, 16
      %v1033 = vrot.slane %v1031, 4
      %v1034 = vor.u32 %v1033, %v1029
      %v1035 = vrot.slane %v1034, 4
      %v1037 = vshll.u32 %v824, 16
      %v1039 = vrot.slane %v1037, 5
      %v1040 = vsel %vm249, %v1035, %v1039
      %v1042 = vshrl.u32 %v825, 16
      %v1044 = vrot.slane %v1042, 4
      %v1045 = vshll.u32 %v825, 16
      %v1047 = vrot.slane %v1045, 5
      %v1048 = vor.u32 %v1044, %v1047
      %v1049 = vrot.slane %v1048, 4
      %v1051 = vshll.u32 %v826, 16
      %v1053 = vrot.slane %v1051, 5
      %v1054 = vsel %vm249, %v1049, %v1053
      %v1055 = vshrl.u32 %v826, 16
      %v1057 = vrot.slane %v1055, 4
      %v1058 = vor.u32 %v1057, %v1053
      %v1059 = vrot.slane %v1058, 4
      %v1061 = vshll.u32 %v827, 16
      %v1063 = vrot.slane %v1061, 5
      %v1064 = vsel %vm249, %v1059, %v1063
      %v1066 = vshrl.u32 %v828, 16
      %v1068 = vrot.slane %v1066, 4
      %v1069 = vshll.u32 %v828, 16
      %v1071 = vrot.slane %v1069, 5
      %v1072 = vor.u32 %v1068, %v1071
      %v1073 = vrot.slane %v1072, 4
      %v1075 = vshll.u32 %v829, 16
      %v1077 = vrot.slane %v1075, 5
      %v1078 = vsel %vm249, %v1073, %v1077
      %v1079 = vshrl.u32 %v829, 16
      %v1081 = vrot.slane %v1079, 4
      %v1082 = vor.u32 %v1081, %v1077
      %v1083 = vrot.slane %v1082, 4
      %v1085 = vshll.u32 %v830, 16
      %v1087 = vrot.slane %v1085, 5
      %v1088 = vsel %vm249, %v1083, %v1087
      %v1090 = vshrl.u32 %v831, 16
      %v1092 = vrot.slane %v1090, 4
      %v1093 = vshll.u32 %v831, 16
      %v1095 = vrot.slane %v1093, 5
      %v1096 = vor.u32 %v1092, %v1095
      %v1097 = vrot.slane %v1096, 4
      %v1099 = vshll.u32 %v832, 16
      %v1101 = vrot.slane %v1099, 5
      %v1102 = vsel %vm249, %v1097, %v1101
      %v1103 = vshrl.u32 %v832, 16
      %v1105 = vrot.slane %v1103, 4
      %v1106 = vor.u32 %v1105, %v1101
      %v1107 = vrot.slane %v1106, 4
      %v1109 = vshll.u32 %v833, 16
      %v1111 = vrot.slane %v1109, 5
      %v1112 = vsel %vm249, %v1107, %v1111
      %v1114 = vshrl.u32 %v834, 16
      %v1116 = vrot.slane %v1114, 4
      %v1117 = vshll.u32 %v834, 16
      %v1119 = vrot.slane %v1117, 5
      %v1120 = vor.u32 %v1116, %v1119
      %v1121 = vrot.slane %v1120, 4
      %v1123 = vshll.u32 %v835, 16
      %v1125 = vrot.slane %v1123, 5
      %v1126 = vsel %vm249, %v1121, %v1125
      %v1127 = vshrl.u32 %v835, 16
      %v1129 = vrot.slane %v1127, 4
      %v1130 = vor.u32 %v1129, %v1125
      %v1131 = vrot.slane %v1130, 4
      %v1133 = vshll.u32 %v836, 16
      %v1135 = vrot.slane %v1133, 5
      %v1136 = vsel %vm249, %v1131, %v1135
      %v1138 = vshrl.u32 %v837, 16
      %v1140 = vrot.slane %v1138, 4
      %v1141 = vshll.u32 %v837, 16
      %v1143 = vrot.slane %v1141, 5
      %v1144 = vor.u32 %v1140, %v1143
      %v1145 = vrot.slane %v1144, 4
      %v1147 = vshll.u32 %v838, 16
      %v1149 = vrot.slane %v1147, 5
      %v1150 = vsel %vm249, %v1145, %v1149
      %v1151 = vshrl.u32 %v838, 16
      %v1153 = vrot.slane %v1151, 4
      %v1154 = vor.u32 %v1153, %v1149
      %v1155 = vrot.slane %v1154, 4
      %v1157 = vshll.u32 %v839, 16
      %v1159 = vrot.slane %v1157, 5
      %v1160 = vsel %vm249, %v1155, %v1159
      %v1162 = vshrl.u32 %v840, 16
      %v1164 = vrot.slane %v1162, 4
      %v1165 = vshll.u32 %v840, 16
      %v1167 = vrot.slane %v1165, 5
      %v1168 = vor.u32 %v1164, %v1167
      %v1169 = vrot.slane %v1168, 4
      %v1171 = vshll.u32 %v841, 16
      %v1173 = vrot.slane %v1171, 5
      %v1174 = vsel %vm249, %v1169, %v1173
      %v1175 = vshrl.u32 %v841, 16
      %v1177 = vrot.slane %v1175, 4
      %v1178 = vor.u32 %v1177, %v1173
      %v1179 = vrot.slane %v1178, 4
      %v1181 = vshll.u32 %v842, 16
      %v1183 = vrot.slane %v1181, 5
      %v1184 = vsel %vm249, %v1179, %v1183
      %v1186 = vshrl.u32 %v843, 16
      %v1188 = vrot.slane %v1186, 4
      %v1189 = vshll.u32 %v843, 16
      %v1191 = vrot.slane %v1189, 5
      %v1192 = vor.u32 %v1188, %v1191
      %v1193 = vrot.slane %v1192, 4
      %v1195 = vshll.u32 %v844, 16
      %v1197 = vrot.slane %v1195, 5
      %v1198 = vsel %vm249, %v1193, %v1197
      %v1199 = vshrl.u32 %v844, 16
      %v1201 = vrot.slane %v1199, 4
      %v1202 = vor.u32 %v1201, %v1197
      %v1203 = vrot.slane %v1202, 4
      %v1205 = vshll.u32 %v845, 16
      %v1207 = vrot.slane %v1205, 5
      %v1208 = vsel %vm249, %v1203, %v1207
      %v1210 = vshrl.u32 %v846, 16
      %v1212 = vrot.slane %v1210, 4
      %v1213 = vshll.u32 %v846, 16
      %v1215 = vrot.slane %v1213, 5
      %v1216 = vor.u32 %v1212, %v1215
      %v1217 = vrot.slane %v1216, 4
      %v1219 = vshll.u32 %v847, 16
      %v1221 = vrot.slane %v1219, 5
      %v1222 = vsel %vm249, %v1217, %v1221
      %v1223 = vshrl.u32 %v847, 16
      %v1225 = vrot.slane %v1223, 4
      %v1226 = vor.u32 %v1225, %v1221
      %v1227 = vrot.slane %v1226, 4
      %v1229 = vshll.u32 %v848, 16
      %v1231 = vrot.slane %v1229, 5
      %v1232 = vsel %vm249, %v1227, %v1231
      %v1281 = vrot.slane %v801, 5
      %v1282 = vrot.slane %v1281, 4
      %v1283 = vrot.slane %v802, 5
      %v1284 = vsel %vm684, %v1282, %v1283
      %v1285 = vrot.slane %v1283, 4
      %v1286 = vrot.slane %v803, 5
      %v1287 = vsel %vm684, %v1285, %v1286
      %v1288 = vrot.slane %v804, 5
      %v1289 = vrot.slane %v1288, 4
      %v1290 = vrot.slane %v805, 5
      %v1291 = vsel %vm684, %v1289, %v1290
      %v1292 = vrot.slane %v1290, 4
      %v1293 = vrot.slane %v806, 5
      %v1294 = vsel %vm684, %v1292, %v1293
      %v1295 = vrot.slane %v807, 5
      %v1296 = vrot.slane %v1295, 4
      %v1297 = vrot.slane %v808, 5
      %v1298 = vsel %vm684, %v1296, %v1297
      %v1299 = vrot.slane %v1297, 4
      %v1300 = vrot.slane %v809, 5
      %v1301 = vsel %vm684, %v1299, %v1300
      %v1302 = vrot.slane %v810, 5
      %v1303 = vrot.slane %v1302, 4
      %v1304 = vrot.slane %v811, 5
      %v1305 = vsel %vm684, %v1303, %v1304
      %v1306 = vrot.slane %v1304, 4
      %v1307 = vrot.slane %v812, 5
      %v1308 = vsel %vm684, %v1306, %v1307
      %v1309 = vrot.slane %v813, 5
      %v1310 = vrot.slane %v1309, 4
      %v1311 = vrot.slane %v814, 5
      %v1312 = vsel %vm684, %v1310, %v1311
      %v1313 = vrot.slane %v1311, 4
      %v1314 = vrot.slane %v815, 5
      %v1315 = vsel %vm684, %v1313, %v1314
      %v1316 = vrot.slane %v816, 5
      %v1317 = vrot.slane %v1316, 4
      %v1318 = vrot.slane %v817, 5
      %v1319 = vsel %vm684, %v1317, %v1318
      %v1320 = vrot.slane %v1318, 4
      %v1321 = vrot.slane %v818, 5
      %v1322 = vsel %vm684, %v1320, %v1321
      %v1323 = vrot.slane %v819, 5
      %v1324 = vrot.slane %v1323, 4
      %v1325 = vrot.slane %v820, 5
      %v1326 = vsel %vm684, %v1324, %v1325
      %v1327 = vrot.slane %v1325, 4
      %v1328 = vrot.slane %v821, 5
      %v1329 = vsel %vm684, %v1327, %v1328
      %v1330 = vrot.slane %v822, 5
      %v1331 = vrot.slane %v1330, 4
      %v1332 = vrot.slane %v823, 5
      %v1333 = vsel %vm684, %v1331, %v1332
      %v1334 = vrot.slane %v1332, 4
      %v1335 = vrot.slane %v824, 5
      %v1336 = vsel %vm684, %v1334, %v1335
      %v1337 = vrot.slane %v825, 5
      %v1338 = vrot.slane %v1337, 4
      %v1339 = vrot.slane %v826, 5
      %v1340 = vsel %vm684, %v1338, %v1339
      %v1341 = vrot.slane %v1339, 4
      %v1342 = vrot.slane %v827, 5
      %v1343 = vsel %vm684, %v1341, %v1342
      %v1344 = vrot.slane %v828, 5
      %v1345 = vrot.slane %v1344, 4
      %v1346 = vrot.slane %v829, 5
      %v1347 = vsel %vm684, %v1345, %v1346
      %v1348 = vrot.slane %v1346, 4
      %v1349 = vrot.slane %v830, 5
      %v1350 = vsel %vm684, %v1348, %v1349
      %v1351 = vrot.slane %v831, 5
      %v1352 = vrot.slane %v1351, 4
      %v1353 = vrot.slane %v832, 5
      %v1354 = vsel %vm684, %v1352, %v1353
      %v1355 = vrot.slane %v1353, 4
      %v1356 = vrot.slane %v833, 5
      %v1357 = vsel %vm684, %v1355, %v1356
      %v1358 = vrot.slane %v834, 5
      %v1359 = vrot.slane %v1358, 4
      %v1360 = vrot.slane %v835, 5
      %v1361 = vsel %vm684, %v1359, %v1360
      %v1362 = vrot.slane %v1360, 4
      %v1363 = vrot.slane %v836, 5
      %v1364 = vsel %vm684, %v1362, %v1363
      %v1365 = vrot.slane %v837, 5
      %v1366 = vrot.slane %v1365, 4
      %v1367 = vrot.slane %v838, 5
      %v1368 = vsel %vm684, %v1366, %v1367
      %v1369 = vrot.slane %v1367, 4
      %v1370 = vrot.slane %v839, 5
      %v1371 = vsel %vm684, %v1369, %v1370
      %v1372 = vrot.slane %v840, 5
      %v1373 = vrot.slane %v1372, 4
      %v1374 = vrot.slane %v841, 5
      %v1375 = vsel %vm684, %v1373, %v1374
      %v1376 = vrot.slane %v1374, 4
      %v1377 = vrot.slane %v842, 5
      %v1378 = vsel %vm684, %v1376, %v1377
      %v1379 = vrot.slane %v843, 5
      %v1380 = vrot.slane %v1379, 4
      %v1381 = vrot.slane %v844, 5
      %v1382 = vsel %vm684, %v1380, %v1381
      %v1383 = vrot.slane %v1381, 4
      %v1384 = vrot.slane %v845, 5
      %v1385 = vsel %vm684, %v1383, %v1384
      %v1386 = vrot.slane %v846, 5
      %v1387 = vrot.slane %v1386, 4
      %v1388 = vrot.slane %v847, 5
      %v1389 = vsel %vm684, %v1387, %v1388
      %v1390 = vrot.slane %v1388, 4
      %v1391 = vrot.slane %v848, 5
      %v1392 = vsel %vm684, %v1390, %v1391
      %s1393 = sadd.s32 %s195, 2
      %s1394 = smul.u32 %s1393, 3
      %s1395 = smul.addr %s1394, 4
      %s1396 = scalar_lea.vmem %s183, %s1395
      %v1397 = vld [vmem:[%s1396] sm:$0xf]
      %v1398 = vld [vmem:[%s1396 + $0x4] sm:$0xf]
      %v1399 = vld [vmem:[%s1396 + $0x8] sm:$0x1]
      %v1400 = vld [vmem:[%s1396 + $0xc] sm:$0xf]
      %v1401 = vld [vmem:[%s1396 + $0x10] sm:$0xf]
      %v1402 = vld [vmem:[%s1396 + $0x14] sm:$0x1]
      %v1403 = vld [vmem:[%s1396 + $0x18] sm:$0xf]
      %v1404 = vld [vmem:[%s1396 + $0x1c] sm:$0xf]
      %v1405 = vld [vmem:[%s1396 + $0x20] sm:$0x1]
      %v1406 = vld [vmem:[%s1396 + $0x24] sm:$0xf]
      %v1407 = vld [vmem:[%s1396 + $0x28] sm:$0xf]
      %v1408 = vld [vmem:[%s1396 + $0x2c] sm:$0x1]
      %v1409 = vld [vmem:[%s1396 + $0x30] sm:$0xf]
      %v1410 = vld [vmem:[%s1396 + $0x34] sm:$0xf]
      %v1411 = vld [vmem:[%s1396 + $0x38] sm:$0x1]
      %v1412 = vld [vmem:[%s1396 + $0x3c] sm:$0xf]
      %v1413 = vld [vmem:[%s1396 + $0x40] sm:$0xf]
      %v1414 = vld [vmem:[%s1396 + $0x44] sm:$0x1]
      %v1415 = vld [vmem:[%s1396 + $0x48] sm:$0xf]
      %v1416 = vld [vmem:[%s1396 + $0x4c] sm:$0xf]
      %v1417 = vld [vmem:[%s1396 + $0x50] sm:$0x1]
      %v1418 = vld [vmem:[%s1396 + $0x54] sm:$0xf]
      %v1419 = vld [vmem:[%s1396 + $0x58] sm:$0xf]
      %v1420 = vld [vmem:[%s1396 + $0x5c] sm:$0x1]
      %v1421 = vld [vmem:[%s1396 + $0x60] sm:$0xf]
      %v1422 = vld [vmem:[%s1396 + $0x64] sm:$0xf]
      %v1423 = vld [vmem:[%s1396 + $0x68] sm:$0x1]
      %v1424 = vld [vmem:[%s1396 + $0x6c] sm:$0xf]
      %v1425 = vld [vmem:[%s1396 + $0x70] sm:$0xf]
      %v1426 = vld [vmem:[%s1396 + $0x74] sm:$0x1]
      %v1427 = vld [vmem:[%s1396 + $0x78] sm:$0xf]
      %v1428 = vld [vmem:[%s1396 + $0x7c] sm:$0xf]
      %v1429 = vld [vmem:[%s1396 + $0x80] sm:$0x1]
      %v1430 = vld [vmem:[%s1396 + $0x84] sm:$0xf]
      %v1431 = vld [vmem:[%s1396 + $0x88] sm:$0xf]
      %v1432 = vld [vmem:[%s1396 + $0x8c] sm:$0x1]
      %v1433 = vld [vmem:[%s1396 + $0x90] sm:$0xf]
      %v1434 = vld [vmem:[%s1396 + $0x94] sm:$0xf]
      %v1435 = vld [vmem:[%s1396 + $0x98] sm:$0x1]
      %v1436 = vld [vmem:[%s1396 + $0x9c] sm:$0xf]
      %v1437 = vld [vmem:[%s1396 + $0xa0] sm:$0xf]
      %v1438 = vld [vmem:[%s1396 + $0xa4] sm:$0x1]
      %v1439 = vld [vmem:[%s1396 + $0xa8] sm:$0xf]
      %v1440 = vld [vmem:[%s1396 + $0xac] sm:$0xf]
      %v1441 = vld [vmem:[%s1396 + $0xb0] sm:$0x1]
      %v1442 = vld [vmem:[%s1396 + $0xb4] sm:$0xf]
      %v1443 = vld [vmem:[%s1396 + $0xb8] sm:$0xf]
      %v1444 = vld [vmem:[%s1396 + $0xbc] sm:$0x1]
      %v1446 = vshrl.u32 %v1397, 16
      %v1448 = vrot.slane %v1446, 4
      %v1449 = vshll.u32 %v1397, 16
      %v1451 = vrot.slane %v1449, 5
      %v1452 = vor.u32 %v1448, %v1451
      %v1453 = vrot.slane %v1452, 4
      %v1455 = vshll.u32 %v1398, 16
      %v1457 = vrot.slane %v1455, 5
      %v1458 = vsel %vm249, %v1453, %v1457
      %v1459 = vshrl.u32 %v1398, 16
      %v1461 = vrot.slane %v1459, 4
      %v1462 = vor.u32 %v1461, %v1457
      %v1463 = vrot.slane %v1462, 4
      %v1465 = vshll.u32 %v1399, 16
      %v1467 = vrot.slane %v1465, 5
      %v1468 = vsel %vm249, %v1463, %v1467
      %v1470 = vshrl.u32 %v1400, 16
      %v1472 = vrot.slane %v1470, 4
      %v1473 = vshll.u32 %v1400, 16
      %v1475 = vrot.slane %v1473, 5
      %v1476 = vor.u32 %v1472, %v1475
      %v1477 = vrot.slane %v1476, 4
      %v1479 = vshll.u32 %v1401, 16
      %v1481 = vrot.slane %v1479, 5
      %v1482 = vsel %vm249, %v1477, %v1481
      %v1483 = vshrl.u32 %v1401, 16
      %v1485 = vrot.slane %v1483, 4
      %v1486 = vor.u32 %v1485, %v1481
      %v1487 = vrot.slane %v1486, 4
      %v1489 = vshll.u32 %v1402, 16
      %v1491 = vrot.slane %v1489, 5
      %v1492 = vsel %vm249, %v1487, %v1491
      %v1494 = vshrl.u32 %v1403, 16
      %v1496 = vrot.slane %v1494, 4
      %v1497 = vshll.u32 %v1403, 16
      %v1499 = vrot.slane %v1497, 5
      %v1500 = vor.u32 %v1496, %v1499
      %v1501 = vrot.slane %v1500, 4
      %v1503 = vshll.u32 %v1404, 16
      %v1505 = vrot.slane %v1503, 5
      %v1506 = vsel %vm249, %v1501, %v1505
      %v1507 = vshrl.u32 %v1404, 16
      %v1509 = vrot.slane %v1507, 4
      %v1510 = vor.u32 %v1509, %v1505
      %v1511 = vrot.slane %v1510, 4
      %v1513 = vshll.u32 %v1405, 16
      %v1515 = vrot.slane %v1513, 5
      %v1516 = vsel %vm249, %v1511, %v1515
      %v1518 = vshrl.u32 %v1406, 16
      %v1520 = vrot.slane %v1518, 4
      %v1521 = vshll.u32 %v1406, 16
      %v1523 = vrot.slane %v1521, 5
      %v1524 = vor.u32 %v1520, %v1523
      %v1525 = vrot.slane %v1524, 4
      %v1527 = vshll.u32 %v1407, 16
      %v1529 = vrot.slane %v1527, 5
      %v1530 = vsel %vm249, %v1525, %v1529
      %v1531 = vshrl.u32 %v1407, 16
      %v1533 = vrot.slane %v1531, 4
      %v1534 = vor.u32 %v1533, %v1529
      %v1535 = vrot.slane %v1534, 4
      %v1537 = vshll.u32 %v1408, 16
      %v1539 = vrot.slane %v1537, 5
      %v1540 = vsel %vm249, %v1535, %v1539
      %v1542 = vshrl.u32 %v1409, 16
      %v1544 = vrot.slane %v1542, 4
      %v1545 = vshll.u32 %v1409, 16
      %v1547 = vrot.slane %v1545, 5
      %v1548 = vor.u32 %v1544, %v1547
      %v1549 = vrot.slane %v1548, 4
      %v1551 = vshll.u32 %v1410, 16
      %v1553 = vrot.slane %v1551, 5
      %v1554 = vsel %vm249, %v1549, %v1553
      %v1555 = vshrl.u32 %v1410, 16
      %v1557 = vrot.slane %v1555, 4
      %v1558 = vor.u32 %v1557, %v1553
      %v1559 = vrot.slane %v1558, 4
      %v1561 = vshll.u32 %v1411, 16
      %v1563 = vrot.slane %v1561, 5
      %v1564 = vsel %vm249, %v1559, %v1563
      %v1566 = vshrl.u32 %v1412, 16
      %v1568 = vrot.slane %v1566, 4
      %v1569 = vshll.u32 %v1412, 16
      %v1571 = vrot.slane %v1569, 5
      %v1572 = vor.u32 %v1568, %v1571
      %v1573 = vrot.slane %v1572, 4
      %v1575 = vshll.u32 %v1413, 16
      %v1577 = vrot.slane %v1575, 5
      %v1578 = vsel %vm249, %v1573, %v1577
      %v1579 = vshrl.u32 %v1413, 16
      %v1581 = vrot.slane %v1579, 4
      %v1582 = vor.u32 %v1581, %v1577
      %v1583 = vrot.slane %v1582, 4
      %v1585 = vshll.u32 %v1414, 16
      %v1587 = vrot.slane %v1585, 5
      %v1588 = vsel %vm249, %v1583, %v1587
      %v1590 = vshrl.u32 %v1415, 16
      %v1592 = vrot.slane %v1590, 4
      %v1593 = vshll.u32 %v1415, 16
      %v1595 = vrot.slane %v1593, 5
      %v1596 = vor.u32 %v1592, %v1595
      %v1597 = vrot.slane %v1596, 4
      %v1599 = vshll.u32 %v1416, 16
      %v1601 = vrot.slane %v1599, 5
      %v1602 = vsel %vm249, %v1597, %v1601
      %v1603 = vshrl.u32 %v1416, 16
      %v1605 = vrot.slane %v1603, 4
      %v1606 = vor.u32 %v1605, %v1601
      %v1607 = vrot.slane %v1606, 4
      %v1609 = vshll.u32 %v1417, 16
      %v1611 = vrot.slane %v1609, 5
      %v1612 = vsel %vm249, %v1607, %v1611
      %v1614 = vshrl.u32 %v1418, 16
      %v1616 = vrot.slane %v1614, 4
      %v1617 = vshll.u32 %v1418, 16
      %v1619 = vrot.slane %v1617, 5
      %v1620 = vor.u32 %v1616, %v1619
      %v1621 = vrot.slane %v1620, 4
      %v1623 = vshll.u32 %v1419, 16
      %v1625 = vrot.slane %v1623, 5
      %v1626 = vsel %vm249, %v1621, %v1625
      %v1627 = vshrl.u32 %v1419, 16
      %v1629 = vrot.slane %v1627, 4
      %v1630 = vor.u32 %v1629, %v1625
      %v1631 = vrot.slane %v1630, 4
      %v1633 = vshll.u32 %v1420, 16
      %v1635 = vrot.slane %v1633, 5
      %v1636 = vsel %vm249, %v1631, %v1635
      %v1638 = vshrl.u32 %v1421, 16
      %v1640 = vrot.slane %v1638, 4
      %v1641 = vshll.u32 %v1421, 16
      %v1643 = vrot.slane %v1641, 5
      %v1644 = vor.u32 %v1640, %v1643
      %v1645 = vrot.slane %v1644, 4
      %v1647 = vshll.u32 %v1422, 16
      %v1649 = vrot.slane %v1647, 5
      %v1650 = vsel %vm249, %v1645, %v1649
      %v1651 = vshrl.u32 %v1422, 16
      %v1653 = vrot.slane %v1651, 4
      %v1654 = vor.u32 %v1653, %v1649
      %v1655 = vrot.slane %v1654, 4
      %v1657 = vshll.u32 %v1423, 16
      %v1659 = vrot.slane %v1657, 5
      %v1660 = vsel %vm249, %v1655, %v1659
      %v1662 = vshrl.u32 %v1424, 16
      %v1664 = vrot.slane %v1662, 4
      %v1665 = vshll.u32 %v1424, 16
      %v1667 = vrot.slane %v1665, 5
      %v1668 = vor.u32 %v1664, %v1667
      %v1669 = vrot.slane %v1668, 4
      %v1671 = vshll.u32 %v1425, 16
      %v1673 = vrot.slane %v1671, 5
      %v1674 = vsel %vm249, %v1669, %v1673
      %v1675 = vshrl.u32 %v1425, 16
      %v1677 = vrot.slane %v1675, 4
      %v1678 = vor.u32 %v1677, %v1673
      %v1679 = vrot.slane %v1678, 4
      %v1681 = vshll.u32 %v1426, 16
      %v1683 = vrot.slane %v1681, 5
      %v1684 = vsel %vm249, %v1679, %v1683
      %v1686 = vshrl.u32 %v1427, 16
      %v1688 = vrot.slane %v1686, 4
      %v1689 = vshll.u32 %v1427, 16
      %v1691 = vrot.slane %v1689, 5
      %v1692 = vor.u32 %v1688, %v1691
      %v1693 = vrot.slane %v1692, 4
      %v1695 = vshll.u32 %v1428, 16
      %v1697 = vrot.slane %v1695, 5
      %v1698 = vsel %vm249, %v1693, %v1697
      %v1699 = vshrl.u32 %v1428, 16
      %v1701 = vrot.slane %v1699, 4
      %v1702 = vor.u32 %v1701, %v1697
      %v1703 = vrot.slane %v1702, 4
      %v1705 = vshll.u32 %v1429, 16
      %v1707 = vrot.slane %v1705, 5
      %v1708 = vsel %vm249, %v1703, %v1707
      %v1710 = vshrl.u32 %v1430, 16
      %v1712 = vrot.slane %v1710, 4
      %v1713 = vshll.u32 %v1430, 16
      %v1715 = vrot.slane %v1713, 5
      %v1716 = vor.u32 %v1712, %v1715
      %v1717 = vrot.slane %v1716, 4
      %v1719 = vshll.u32 %v1431, 16
      %v1721 = vrot.slane %v1719, 5
      %v1722 = vsel %vm249, %v1717, %v1721
      %v1723 = vshrl.u32 %v1431, 16
      %v1725 = vrot.slane %v1723, 4
      %v1726 = vor.u32 %v1725, %v1721
      %v1727 = vrot.slane %v1726, 4
      %v1729 = vshll.u32 %v1432, 16
      %v1731 = vrot.slane %v1729, 5
      %v1732 = vsel %vm249, %v1727, %v1731
      %v1734 = vshrl.u32 %v1433, 16
      %v1736 = vrot.slane %v1734, 4
      %v1737 = vshll.u32 %v1433, 16
      %v1739 = vrot.slane %v1737, 5
      %v1740 = vor.u32 %v1736, %v1739
      %v1741 = vrot.slane %v1740, 4
      %v1743 = vshll.u32 %v1434, 16
      %v1745 = vrot.slane %v1743, 5
      %v1746 = vsel %vm249, %v1741, %v1745
      %v1747 = vshrl.u32 %v1434, 16
      %v1749 = vrot.slane %v1747, 4
      %v1750 = vor.u32 %v1749, %v1745
      %v1751 = vrot.slane %v1750, 4
      %v1753 = vshll.u32 %v1435, 16
      %v1755 = vrot.slane %v1753, 5
      %v1756 = vsel %vm249, %v1751, %v1755
      %v1758 = vshrl.u32 %v1436, 16
      %v1760 = vrot.slane %v1758, 4
      %v1761 = vshll.u32 %v1436, 16
      %v1763 = vrot.slane %v1761, 5
      %v1764 = vor.u32 %v1760, %v1763
      %v1765 = vrot.slane %v1764, 4
      %v1767 = vshll.u32 %v1437, 16
      %v1769 = vrot.slane %v1767, 5
      %v1770 = vsel %vm249, %v1765, %v1769
      %v1771 = vshrl.u32 %v1437, 16
      %v1773 = vrot.slane %v1771, 4
      %v1774 = vor.u32 %v1773, %v1769
      %v1775 = vrot.slane %v1774, 4
      %v1777 = vshll.u32 %v1438, 16
      %v1779 = vrot.slane %v1777, 5
      %v1780 = vsel %vm249, %v1775, %v1779
      %v1782 = vshrl.u32 %v1439, 16
      %v1784 = vrot.slane %v1782, 4
      %v1785 = vshll.u32 %v1439, 16
      %v1787 = vrot.slane %v1785, 5
      %v1788 = vor.u32 %v1784, %v1787
      %v1789 = vrot.slane %v1788, 4
      %v1791 = vshll.u32 %v1440, 16
      %v1793 = vrot.slane %v1791, 5
      %v1794 = vsel %vm249, %v1789, %v1793
      %v1795 = vshrl.u32 %v1440, 16
      %v1797 = vrot.slane %v1795, 4
      %v1798 = vor.u32 %v1797, %v1793
      %v1799 = vrot.slane %v1798, 4
      %v1801 = vshll.u32 %v1441, 16
      %v1803 = vrot.slane %v1801, 5
      %v1804 = vsel %vm249, %v1799, %v1803
      %v1806 = vshrl.u32 %v1442, 16
      %v1808 = vrot.slane %v1806, 4
      %v1809 = vshll.u32 %v1442, 16
      %v1811 = vrot.slane %v1809, 5
      %v1812 = vor.u32 %v1808, %v1811
      %v1813 = vrot.slane %v1812, 4
      %v1815 = vshll.u32 %v1443, 16
      %v1817 = vrot.slane %v1815, 5
      %v1818 = vsel %vm249, %v1813, %v1817
      %v1819 = vshrl.u32 %v1443, 16
      %v1821 = vrot.slane %v1819, 4
      %v1822 = vor.u32 %v1821, %v1817
      %v1823 = vrot.slane %v1822, 4
      %v1825 = vshll.u32 %v1444, 16
      %v1827 = vrot.slane %v1825, 5
      %v1828 = vsel %vm249, %v1823, %v1827
      %v1877 = vrot.slane %v1397, 5
      %v1878 = vrot.slane %v1877, 4
      %v1879 = vrot.slane %v1398, 5
      %v1880 = vsel %vm684, %v1878, %v1879
      %v1881 = vrot.slane %v1879, 4
      %v1882 = vrot.slane %v1399, 5
      %v1883 = vsel %vm684, %v1881, %v1882
      %v1884 = vrot.slane %v1400, 5
      %v1885 = vrot.slane %v1884, 4
      %v1886 = vrot.slane %v1401, 5
      %v1887 = vsel %vm684, %v1885, %v1886
      %v1888 = vrot.slane %v1886, 4
      %v1889 = vrot.slane %v1402, 5
      %v1890 = vsel %vm684, %v1888, %v1889
      %v1891 = vrot.slane %v1403, 5
      %v1892 = vrot.slane %v1891, 4
      %v1893 = vrot.slane %v1404, 5
      %v1894 = vsel %vm684, %v1892, %v1893
      %v1895 = vrot.slane %v1893, 4
      %v1896 = vrot.slane %v1405, 5
      %v1897 = vsel %vm684, %v1895, %v1896
      %v1898 = vrot.slane %v1406, 5
      %v1899 = vrot.slane %v1898, 4
      %v1900 = vrot.slane %v1407, 5
      %v1901 = vsel %vm684, %v1899, %v1900
      %v1902 = vrot.slane %v1900, 4
      %v1903 = vrot.slane %v1408, 5
      %v1904 = vsel %vm684, %v1902, %v1903
      %v1905 = vrot.slane %v1409, 5
      %v1906 = vrot.slane %v1905, 4
      %v1907 = vrot.slane %v1410, 5
      %v1908 = vsel %vm684, %v1906, %v1907
      %v1909 = vrot.slane %v1907, 4
      %v1910 = vrot.slane %v1411, 5
      %v1911 = vsel %vm684, %v1909, %v1910
      %v1912 = vrot.slane %v1412, 5
      %v1913 = vrot.slane %v1912, 4
      %v1914 = vrot.slane %v1413, 5
      %v1915 = vsel %vm684, %v1913, %v1914
      %v1916 = vrot.slane %v1914, 4
      %v1917 = vrot.slane %v1414, 5
      %v1918 = vsel %vm684, %v1916, %v1917
      %v1919 = vrot.slane %v1415, 5
      %v1920 = vrot.slane %v1919, 4
      %v1921 = vrot.slane %v1416, 5
      %v1922 = vsel %vm684, %v1920, %v1921
      %v1923 = vrot.slane %v1921, 4
      %v1924 = vrot.slane %v1417, 5
      %v1925 = vsel %vm684, %v1923, %v1924
      %v1926 = vrot.slane %v1418, 5
      %v1927 = vrot.slane %v1926, 4
      %v1928 = vrot.slane %v1419, 5
      %v1929 = vsel %vm684, %v1927, %v1928
      %v1930 = vrot.slane %v1928, 4
      %v1931 = vrot.slane %v1420, 5
      %v1932 = vsel %vm684, %v1930, %v1931
      %v1933 = vrot.slane %v1421, 5
      %v1934 = vrot.slane %v1933, 4
      %v1935 = vrot.slane %v1422, 5
      %v1936 = vsel %vm684, %v1934, %v1935
      %v1937 = vrot.slane %v1935, 4
      %v1938 = vrot.slane %v1423, 5
      %v1939 = vsel %vm684, %v1937, %v1938
      %v1940 = vrot.slane %v1424, 5
      %v1941 = vrot.slane %v1940, 4
      %v1942 = vrot.slane %v1425, 5
      %v1943 = vsel %vm684, %v1941, %v1942
      %v1944 = vrot.slane %v1942, 4
      %v1945 = vrot.slane %v1426, 5
      %v1946 = vsel %vm684, %v1944, %v1945
      %v1947 = vrot.slane %v1427, 5
      %v1948 = vrot.slane %v1947, 4
      %v1949 = vrot.slane %v1428, 5
      %v1950 = vsel %vm684, %v1948, %v1949
      %v1951 = vrot.slane %v1949, 4
      %v1952 = vrot.slane %v1429, 5
      %v1953 = vsel %vm684, %v1951, %v1952
      %v1954 = vrot.slane %v1430, 5
      %v1955 = vrot.slane %v1954, 4
      %v1956 = vrot.slane %v1431, 5
      %v1957 = vsel %vm684, %v1955, %v1956
      %v1958 = vrot.slane %v1956, 4
      %v1959 = vrot.slane %v1432, 5
      %v1960 = vsel %vm684, %v1958, %v1959
      %v1961 = vrot.slane %v1433, 5
      %v1962 = vrot.slane %v1961, 4
      %v1963 = vrot.slane %v1434, 5
      %v1964 = vsel %vm684, %v1962, %v1963
      %v1965 = vrot.slane %v1963, 4
      %v1966 = vrot.slane %v1435, 5
      %v1967 = vsel %vm684, %v1965, %v1966
      %v1968 = vrot.slane %v1436, 5
      %v1969 = vrot.slane %v1968, 4
      %v1970 = vrot.slane %v1437, 5
      %v1971 = vsel %vm684, %v1969, %v1970
      %v1972 = vrot.slane %v1970, 4
      %v1973 = vrot.slane %v1438, 5
      %v1974 = vsel %vm684, %v1972, %v1973
      %v1975 = vrot.slane %v1439, 5
      %v1976 = vrot.slane %v1975, 4
      %v1977 = vrot.slane %v1440, 5
      %v1978 = vsel %vm684, %v1976, %v1977
      %v1979 = vrot.slane %v1977, 4
      %v1980 = vrot.slane %v1441, 5
      %v1981 = vsel %vm684, %v1979, %v1980
      %v1982 = vrot.slane %v1442, 5
      %v1983 = vrot.slane %v1982, 4
      %v1984 = vrot.slane %v1443, 5
      %v1985 = vsel %vm684, %v1983, %v1984
      %v1986 = vrot.slane %v1984, 4
      %v1987 = vrot.slane %v1444, 5
      %v1988 = vsel %vm684, %v1986, %v1987
      %v1989 = vunpack.c.l.b16 %v199
      %v1990 = vunpack.c.l.b16 %v200
      %v1991 = vunpack.c.l.b16 %v202
      %v1992 = vunpack.c.l.b16 %v203
      %v1993 = vunpack.c.l.b16 %v205
      %v1994 = vunpack.c.l.b16 %v206
      %v1995 = vunpack.c.l.b16 %v208
      %v1996 = vunpack.c.l.b16 %v209
      %v1997 = vunpack.c.l.b16 %v211
      %v1998 = vunpack.c.l.b16 %v212
      %v1999 = vunpack.c.l.b16 %v214
      %v2000 = vunpack.c.l.b16 %v215
      %v2001 = vunpack.c.l.b16 %v217
      %v2002 = vunpack.c.l.b16 %v218
      %v2003 = vunpack.c.l.b16 %v220
      %v2004 = vunpack.c.l.b16 %v221
      %v2005 = vunpack.c.l.b16 %v223
      %v2006 = vunpack.c.l.b16 %v224
      %v2007 = vunpack.c.l.b16 %v226
      %v2008 = vunpack.c.l.b16 %v227
      %v2009 = vunpack.c.l.b16 %v229
      %v2010 = vunpack.c.l.b16 %v230
      %v2011 = vunpack.c.l.b16 %v232
      %v2012 = vunpack.c.l.b16 %v233
      %v2013 = vunpack.c.l.b16 %v235
      %v2014 = vunpack.c.l.b16 %v236
      %v2015 = vunpack.c.l.b16 %v238
      %v2016 = vunpack.c.l.b16 %v239
      %v2017 = vunpack.c.l.b16 %v241
      %v2018 = vunpack.c.l.b16 %v242
      %v2019 = vunpack.c.l.b16 %v244
      %v2020 = vunpack.c.l.b16 %v245
      %v2021 = vpack.c.b16 %v1990, %v1989
      %v2022 = vpack.c.b16 %v1992, %v1991
      %v2023 = vpack.c.b16 %v1994, %v1993
      %v2024 = vpack.c.b16 %v1996, %v1995
      %v2025 = vpack.c.b16 %v1998, %v1997
      %v2026 = vpack.c.b16 %v2000, %v1999
      %v2027 = vpack.c.b16 %v2002, %v2001
      %v2028 = vpack.c.b16 %v2004, %v2003
      %v2029 = vpack.c.b16 %v2006, %v2005
      %v2030 = vpack.c.b16 %v2008, %v2007
      %v2031 = vpack.c.b16 %v2010, %v2009
      %v2032 = vpack.c.b16 %v2012, %v2011
      %v2033 = vpack.c.b16 %v2014, %v2013
      %v2034 = vpack.c.b16 %v2016, %v2015
      %v2035 = vpack.c.b16 %v2018, %v2017
      %v2036 = vpack.c.b16 %v2020, %v2019
      %v2037 = vunpack.c.l.b16 %v263
      %v2038 = vunpack.c.l.b16 %v273
      %v2039 = vunpack.c.l.b16 %v287
      %v2040 = vunpack.c.l.b16 %v297
      %v2041 = vunpack.c.l.b16 %v311
      %v2042 = vunpack.c.l.b16 %v321
      %v2043 = vunpack.c.l.b16 %v335
      %v2044 = vunpack.c.l.b16 %v345
      %v2045 = vunpack.c.l.b16 %v359
      %v2046 = vunpack.c.l.b16 %v369
      %v2047 = vunpack.c.l.b16 %v383
      %v2048 = vunpack.c.l.b16 %v393
      %v2049 = vunpack.c.l.b16 %v407
      %v2050 = vunpack.c.l.b16 %v417
      %v2051 = vunpack.c.l.b16 %v431
      %v2052 = vunpack.c.l.b16 %v441
      %v2053 = vunpack.c.l.b16 %v455
      %v2054 = vunpack.c.l.b16 %v465
      %v2055 = vunpack.c.l.b16 %v479
      %v2056 = vunpack.c.l.b16 %v489
      %v2057 = vunpack.c.l.b16 %v503
      %v2058 = vunpack.c.l.b16 %v513
      %v2059 = vunpack.c.l.b16 %v527
      %v2060 = vunpack.c.l.b16 %v537
      %v2061 = vunpack.c.l.b16 %v551
      %v2062 = vunpack.c.l.b16 %v561
      %v2063 = vunpack.c.l.b16 %v575
      %v2064 = vunpack.c.l.b16 %v585
      %v2065 = vunpack.c.l.b16 %v599
      %v2066 = vunpack.c.l.b16 %v609
      %v2067 = vunpack.c.l.b16 %v623
      %v2068 = vunpack.c.l.b16 %v633
      %v2069 = vpack.c.b16 %v2038, %v2037
      %v2070 = vpack.c.b16 %v2040, %v2039
      %v2071 = vpack.c.b16 %v2042, %v2041
      %v2072 = vpack.c.b16 %v2044, %v2043
      %v2073 = vpack.c.b16 %v2046, %v2045
      %v2074 = vpack.c.b16 %v2048, %v2047
      %v2075 = vpack.c.b16 %v2050, %v2049
      %v2076 = vpack.c.b16 %v2052, %v2051
      %v2077 = vpack.c.b16 %v2054, %v2053
      %v2078 = vpack.c.b16 %v2056, %v2055
      %v2079 = vpack.c.b16 %v2058, %v2057
      %v2080 = vpack.c.b16 %v2060, %v2059
      %v2081 = vpack.c.b16 %v2062, %v2061
      %v2082 = vpack.c.b16 %v2064, %v2063
      %v2083 = vpack.c.b16 %v2066, %v2065
      %v2084 = vpack.c.b16 %v2068, %v2067
      %2085 = vrot.lane.b32.xlu0 %v2069, 4
      %v2086 = vpop.permute.xlu0 %2085
      %2087 = vrot.lane.b32.xlu0 %v2070, 4
      %v2088 = vpop.permute.xlu0 %2087
      %2089 = vrot.lane.b32.xlu0 %v2071, 4
      %v2090 = vpop.permute.xlu0 %2089
      %2091 = vrot.lane.b32.xlu0 %v2072, 4
      %v2092 = vpop.permute.xlu0 %2091
      %2093 = vrot.lane.b32.xlu0 %v2073, 4
      %v2094 = vpop.permute.xlu0 %2093
      %2095 = vrot.lane.b32.xlu0 %v2074, 4
      %v2096 = vpop.permute.xlu0 %2095
      %2097 = vrot.lane.b32.xlu0 %v2075, 4
      %v2098 = vpop.permute.xlu0 %2097
      %2099 = vrot.lane.b32.xlu0 %v2076, 4
      %v2100 = vpop.permute.xlu0 %2099
      %2101 = vrot.lane.b32.xlu0 %v2077, 4
      %v2102 = vpop.permute.xlu0 %2101
      %2103 = vrot.lane.b32.xlu0 %v2078, 4
      %v2104 = vpop.permute.xlu0 %2103
      %2105 = vrot.lane.b32.xlu0 %v2079, 4
      %v2106 = vpop.permute.xlu0 %2105
      %2107 = vrot.lane.b32.xlu0 %v2080, 4
      %v2108 = vpop.permute.xlu0 %2107
      %2109 = vrot.lane.b32.xlu0 %v2081, 4
      %v2110 = vpop.permute.xlu0 %2109
      %2111 = vrot.lane.b32.xlu0 %v2082, 4
      %v2112 = vpop.permute.xlu0 %2111
      %2113 = vrot.lane.b32.xlu0 %v2083, 4
      %v2114 = vpop.permute.xlu0 %2113
      %2115 = vrot.lane.b32.xlu0 %v2084, 4
      %v2116 = vpop.permute.xlu0 %2115
      %v2117 = vunpack.c.l.b16 %v688
      %v2118 = vunpack.c.l.b16 %v691
      %v2119 = vunpack.c.l.b16 %v695
      %v2120 = vunpack.c.l.b16 %v698
      %v2121 = vunpack.c.l.b16 %v702
      %v2122 = vunpack.c.l.b16 %v705
      %v2123 = vunpack.c.l.b16 %v709
      %v2124 = vunpack.c.l.b16 %v712
      %v2125 = vunpack.c.l.b16 %v716
      %v2126 = vunpack.c.l.b16 %v719
      %v2127 = vunpack.c.l.b16 %v723
      %v2128 = vunpack.c.l.b16 %v726
      %v2129 = vunpack.c.l.b16 %v730
      %v2130 = vunpack.c.l.b16 %v733
      %v2131 = vunpack.c.l.b16 %v737
      %v2132 = vunpack.c.l.b16 %v740
      %v2133 = vunpack.c.l.b16 %v744
      %v2134 = vunpack.c.l.b16 %v747
      %v2135 = vunpack.c.l.b16 %v751
      %v2136 = vunpack.c.l.b16 %v754
      %v2137 = vunpack.c.l.b16 %v758
      %v2138 = vunpack.c.l.b16 %v761
      %v2139 = vunpack.c.l.b16 %v765
      %v2140 = vunpack.c.l.b16 %v768
      %v2141 = vunpack.c.l.b16 %v772
      %v2142 = vunpack.c.l.b16 %v775
      %v2143 = vunpack.c.l.b16 %v779
      %v2144 = vunpack.c.l.b16 %v782
      %v2145 = vunpack.c.l.b16 %v786
      %v2146 = vunpack.c.l.b16 %v789
      %v2147 = vunpack.c.l.b16 %v793
      %v2148 = vunpack.c.l.b16 %v796
      %v2149 = vpack.c.b16 %v2118, %v2117
      %v2150 = vpack.c.b16 %v2120, %v2119
      %v2151 = vpack.c.b16 %v2122, %v2121
      %v2152 = vpack.c.b16 %v2124, %v2123
      %v2153 = vpack.c.b16 %v2126, %v2125
      %v2154 = vpack.c.b16 %v2128, %v2127
      %v2155 = vpack.c.b16 %v2130, %v2129
      %v2156 = vpack.c.b16 %v2132, %v2131
      %v2157 = vpack.c.b16 %v2134, %v2133
      %v2158 = vpack.c.b16 %v2136, %v2135
      %v2159 = vpack.c.b16 %v2138, %v2137
      %v2160 = vpack.c.b16 %v2140, %v2139
      %v2161 = vpack.c.b16 %v2142, %v2141
      %v2162 = vpack.c.b16 %v2144, %v2143
      %v2163 = vpack.c.b16 %v2146, %v2145
      %v2164 = vpack.c.b16 %v2148, %v2147
      %2165 = vrot.lane.b32.xlu0 %v2149, 8
      %v2166 = vpop.permute.xlu0 %2165
      %2167 = vrot.lane.b32.xlu0 %v2150, 8
      %v2168 = vpop.permute.xlu0 %2167
      %2169 = vrot.lane.b32.xlu0 %v2151, 8
      %v2170 = vpop.permute.xlu0 %2169
      %2171 = vrot.lane.b32.xlu0 %v2152, 8
      %v2172 = vpop.permute.xlu0 %2171
      %2173 = vrot.lane.b32.xlu0 %v2153, 8
      %v2174 = vpop.permute.xlu0 %2173
      %2175 = vrot.lane.b32.xlu0 %v2154, 8
      %v2176 = vpop.permute.xlu0 %2175
      %2177 = vrot.lane.b32.xlu0 %v2155, 8
      %v2178 = vpop.permute.xlu0 %2177
      %2179 = vrot.lane.b32.xlu0 %v2156, 8
      %v2180 = vpop.permute.xlu0 %2179
      %2181 = vrot.lane.b32.xlu0 %v2157, 8
      %v2182 = vpop.permute.xlu0 %2181
      %2183 = vrot.lane.b32.xlu0 %v2158, 8
      %v2184 = vpop.permute.xlu0 %2183
      %2185 = vrot.lane.b32.xlu0 %v2159, 8
      %v2186 = vpop.permute.xlu0 %2185
      %2187 = vrot.lane.b32.xlu0 %v2160, 8
      %v2188 = vpop.permute.xlu0 %2187
      %2189 = vrot.lane.b32.xlu0 %v2161, 8
      %v2190 = vpop.permute.xlu0 %2189
      %2191 = vrot.lane.b32.xlu0 %v2162, 8
      %v2192 = vpop.permute.xlu0 %2191
      %2193 = vrot.lane.b32.xlu0 %v2163, 8
      %v2194 = vpop.permute.xlu0 %2193
      %2195 = vrot.lane.b32.xlu0 %v2164, 8
      %v2196 = vpop.permute.xlu0 %2195
      %v2197 = vunpack.c.l.b16 %v801
      %v2198 = vunpack.c.l.b16 %v802
      %v2199 = vunpack.c.l.b16 %v804
      %v2200 = vunpack.c.l.b16 %v805
      %v2201 = vunpack.c.l.b16 %v807
      %v2202 = vunpack.c.l.b16 %v808
      %v2203 = vunpack.c.l.b16 %v810
      %v2204 = vunpack.c.l.b16 %v811
      %v2205 = vunpack.c.l.b16 %v813
      %v2206 = vunpack.c.l.b16 %v814
      %v2207 = vunpack.c.l.b16 %v816
      %v2208 = vunpack.c.l.b16 %v817
      %v2209 = vunpack.c.l.b16 %v819
      %v2210 = vunpack.c.l.b16 %v820
      %v2211 = vunpack.c.l.b16 %v822
      %v2212 = vunpack.c.l.b16 %v823
      %v2213 = vunpack.c.l.b16 %v825
      %v2214 = vunpack.c.l.b16 %v826
      %v2215 = vunpack.c.l.b16 %v828
      %v2216 = vunpack.c.l.b16 %v829
      %v2217 = vunpack.c.l.b16 %v831
      %v2218 = vunpack.c.l.b16 %v832
      %v2219 = vunpack.c.l.b16 %v834
      %v2220 = vunpack.c.l.b16 %v835
      %v2221 = vunpack.c.l.b16 %v837
      %v2222 = vunpack.c.l.b16 %v838
      %v2223 = vunpack.c.l.b16 %v840
      %v2224 = vunpack.c.l.b16 %v841
      %v2225 = vunpack.c.l.b16 %v843
      %v2226 = vunpack.c.l.b16 %v844
      %v2227 = vunpack.c.l.b16 %v846
      %v2228 = vunpack.c.l.b16 %v847
      %v2229 = vpack.c.b16 %v2198, %v2197
      %v2230 = vpack.c.b16 %v2200, %v2199
      %v2231 = vpack.c.b16 %v2202, %v2201
      %v2232 = vpack.c.b16 %v2204, %v2203
      %v2233 = vpack.c.b16 %v2206, %v2205
      %v2234 = vpack.c.b16 %v2208, %v2207
      %v2235 = vpack.c.b16 %v2210, %v2209
      %v2236 = vpack.c.b16 %v2212, %v2211
      %v2237 = vpack.c.b16 %v2214, %v2213
      %v2238 = vpack.c.b16 %v2216, %v2215
      %v2239 = vpack.c.b16 %v2218, %v2217
      %v2240 = vpack.c.b16 %v2220, %v2219
      %v2241 = vpack.c.b16 %v2222, %v2221
      %v2242 = vpack.c.b16 %v2224, %v2223
      %v2243 = vpack.c.b16 %v2226, %v2225
      %v2244 = vpack.c.b16 %v2228, %v2227
      %2245 = vrot.lane.b32.xlu0 %v2229, 12
      %v2246 = vpop.permute.xlu0 %2245
      %2247 = vrot.lane.b32.xlu0 %v2230, 12
      %v2248 = vpop.permute.xlu0 %2247
      %2249 = vrot.lane.b32.xlu0 %v2231, 12
      %v2250 = vpop.permute.xlu0 %2249
      %2251 = vrot.lane.b32.xlu0 %v2232, 12
      %v2252 = vpop.permute.xlu0 %2251
      %2253 = vrot.lane.b32.xlu0 %v2233, 12
      %v2254 = vpop.permute.xlu0 %2253
      %2255 = vrot.lane.b32.xlu0 %v2234, 12
      %v2256 = vpop.permute.xlu0 %2255
      %2257 = vrot.lane.b32.xlu0 %v2235, 12
      %v2258 = vpop.permute.xlu0 %2257
      %2259 = vrot.lane.b32.xlu0 %v2236, 12
      %v2260 = vpop.permute.xlu0 %2259
      %2261 = vrot.lane.b32.xlu0 %v2237, 12
      %v2262 = vpop.permute.xlu0 %2261
      %2263 = vrot.lane.b32.xlu0 %v2238, 12
      %v2264 = vpop.permute.xlu0 %2263
      %2265 = vrot.lane.b32.xlu0 %v2239, 12
      %v2266 = vpop.permute.xlu0 %2265
      %2267 = vrot.lane.b32.xlu0 %v2240, 12
      %v2268 = vpop.permute.xlu0 %2267
      %2269 = vrot.lane.b32.xlu0 %v2241, 12
      %v2270 = vpop.permute.xlu0 %2269
      %2271 = vrot.lane.b32.xlu0 %v2242, 12
      %v2272 = vpop.permute.xlu0 %2271
      %2273 = vrot.lane.b32.xlu0 %v2243, 12
      %v2274 = vpop.permute.xlu0 %2273
      %2275 = vrot.lane.b32.xlu0 %v2244, 12
      %v2276 = vpop.permute.xlu0 %2275
      %v2277 = vunpack.c.l.b16 %v862
      %v2278 = vunpack.c.l.b16 %v872
      %v2279 = vunpack.c.l.b16 %v886
      %v2280 = vunpack.c.l.b16 %v896
      %v2281 = vunpack.c.l.b16 %v910
      %v2282 = vunpack.c.l.b16 %v920
      %v2283 = vunpack.c.l.b16 %v934
      %v2284 = vunpack.c.l.b16 %v944
      %v2285 = vunpack.c.l.b16 %v958
      %v2286 = vunpack.c.l.b16 %v968
      %v2287 = vunpack.c.l.b16 %v982
      %v2288 = vunpack.c.l.b16 %v992
      %v2289 = vunpack.c.l.b16 %v1006
      %v2290 = vunpack.c.l.b16 %v1016
      %v2291 = vunpack.c.l.b16 %v1030
      %v2292 = vunpack.c.l.b16 %v1040
      %v2293 = vunpack.c.l.b16 %v1054
      %v2294 = vunpack.c.l.b16 %v1064
      %v2295 = vunpack.c.l.b16 %v1078
      %v2296 = vunpack.c.l.b16 %v1088
      %v2297 = vunpack.c.l.b16 %v1102
      %v2298 = vunpack.c.l.b16 %v1112
      %v2299 = vunpack.c.l.b16 %v1126
      %v2300 = vunpack.c.l.b16 %v1136
      %v2301 = vunpack.c.l.b16 %v1150
      %v2302 = vunpack.c.l.b16 %v1160
      %v2303 = vunpack.c.l.b16 %v1174
      %v2304 = vunpack.c.l.b16 %v1184
      %v2305 = vunpack.c.l.b16 %v1198
      %v2306 = vunpack.c.l.b16 %v1208
      %v2307 = vunpack.c.l.b16 %v1222
      %v2308 = vunpack.c.l.b16 %v1232
      %v2309 = vpack.c.b16 %v2278, %v2277
      %v2310 = vpack.c.b16 %v2280, %v2279
      %v2311 = vpack.c.b16 %v2282, %v2281
      %v2312 = vpack.c.b16 %v2284, %v2283
      %v2313 = vpack.c.b16 %v2286, %v2285
      %v2314 = vpack.c.b16 %v2288, %v2287
      %v2315 = vpack.c.b16 %v2290, %v2289
      %v2316 = vpack.c.b16 %v2292, %v2291
      %v2317 = vpack.c.b16 %v2294, %v2293
      %v2318 = vpack.c.b16 %v2296, %v2295
      %v2319 = vpack.c.b16 %v2298, %v2297
      %v2320 = vpack.c.b16 %v2300, %v2299
      %v2321 = vpack.c.b16 %v2302, %v2301
      %v2322 = vpack.c.b16 %v2304, %v2303
      %v2323 = vpack.c.b16 %v2306, %v2305
      %v2324 = vpack.c.b16 %v2308, %v2307
      %2325 = vrot.lane.b32.xlu0 %v2309, 16
      %v2326 = vpop.permute.xlu0 %2325
      %2327 = vrot.lane.b32.xlu0 %v2310, 16
      %v2328 = vpop.permute.xlu0 %2327
      %2329 = vrot.lane.b32.xlu0 %v2311, 16
      %v2330 = vpop.permute.xlu0 %2329
      %2331 = vrot.lane.b32.xlu0 %v2312, 16
      %v2332 = vpop.permute.xlu0 %2331
      %2333 = vrot.lane.b32.xlu0 %v2313, 16
      %v2334 = vpop.permute.xlu0 %2333
      %2335 = vrot.lane.b32.xlu0 %v2314, 16
      %v2336 = vpop.permute.xlu0 %2335
      %2337 = vrot.lane.b32.xlu0 %v2315, 16
      %v2338 = vpop.permute.xlu0 %2337
      %2339 = vrot.lane.b32.xlu0 %v2316, 16
      %v2340 = vpop.permute.xlu0 %2339
      %2341 = vrot.lane.b32.xlu0 %v2317, 16
      %v2342 = vpop.permute.xlu0 %2341
      %2343 = vrot.lane.b32.xlu0 %v2318, 16
      %v2344 = vpop.permute.xlu0 %2343
      %2345 = vrot.lane.b32.xlu0 %v2319, 16
      %v2346 = vpop.permute.xlu0 %2345
      %2347 = vrot.lane.b32.xlu0 %v2320, 16
      %v2348 = vpop.permute.xlu0 %2347
      %2349 = vrot.lane.b32.xlu0 %v2321, 16
      %v2350 = vpop.permute.xlu0 %2349
      %2351 = vrot.lane.b32.xlu0 %v2322, 16
      %v2352 = vpop.permute.xlu0 %2351
      %2353 = vrot.lane.b32.xlu0 %v2323, 16
      %v2354 = vpop.permute.xlu0 %2353
      %2355 = vrot.lane.b32.xlu0 %v2324, 16
      %v2356 = vpop.permute.xlu0 %2355
      %v2357 = vunpack.c.l.b16 %v1284
      %v2358 = vunpack.c.l.b16 %v1287
      %v2359 = vunpack.c.l.b16 %v1291
      %v2360 = vunpack.c.l.b16 %v1294
      %v2361 = vunpack.c.l.b16 %v1298
      %v2362 = vunpack.c.l.b16 %v1301
      %v2363 = vunpack.c.l.b16 %v1305
      %v2364 = vunpack.c.l.b16 %v1308
      %v2365 = vunpack.c.l.b16 %v1312
      %v2366 = vunpack.c.l.b16 %v1315
      %v2367 = vunpack.c.l.b16 %v1319
      %v2368 = vunpack.c.l.b16 %v1322
      %v2369 = vunpack.c.l.b16 %v1326
      %v2370 = vunpack.c.l.b16 %v1329
      %v2371 = vunpack.c.l.b16 %v1333
      %v2372 = vunpack.c.l.b16 %v1336
      %v2373 = vunpack.c.l.b16 %v1340
      %v2374 = vunpack.c.l.b16 %v1343
      %v2375 = vunpack.c.l.b16 %v1347
      %v2376 = vunpack.c.l.b16 %v1350
      %v2377 = vunpack.c.l.b16 %v1354
      %v2378 = vunpack.c.l.b16 %v1357
      %v2379 = vunpack.c.l.b16 %v1361
      %v2380 = vunpack.c.l.b16 %v1364
      %v2381 = vunpack.c.l.b16 %v1368
      %v2382 = vunpack.c.l.b16 %v1371
      %v2383 = vunpack.c.l.b16 %v1375
      %v2384 = vunpack.c.l.b16 %v1378
      %v2385 = vunpack.c.l.b16 %v1382
      %v2386 = vunpack.c.l.b16 %v1385
      %v2387 = vunpack.c.l.b16 %v1389
      %v2388 = vunpack.c.l.b16 %v1392
      %v2389 = vpack.c.b16 %v2358, %v2357
      %v2390 = vpack.c.b16 %v2360, %v2359
      %v2391 = vpack.c.b16 %v2362, %v2361
      %v2392 = vpack.c.b16 %v2364, %v2363
      %v2393 = vpack.c.b16 %v2366, %v2365
      %v2394 = vpack.c.b16 %v2368, %v2367
      %v2395 = vpack.c.b16 %v2370, %v2369
      %v2396 = vpack.c.b16 %v2372, %v2371
      %v2397 = vpack.c.b16 %v2374, %v2373
      %v2398 = vpack.c.b16 %v2376, %v2375
      %v2399 = vpack.c.b16 %v2378, %v2377
      %v2400 = vpack.c.b16 %v2380, %v2379
      %v2401 = vpack.c.b16 %v2382, %v2381
      %v2402 = vpack.c.b16 %v2384, %v2383
      %v2403 = vpack.c.b16 %v2386, %v2385
      %v2404 = vpack.c.b16 %v2388, %v2387
      %2405 = vrot.lane.b32.xlu0 %v2389, 20
      %v2406 = vpop.permute.xlu0 %2405
      %2407 = vrot.lane.b32.xlu0 %v2390, 20
      %v2408 = vpop.permute.xlu0 %2407
      %2409 = vrot.lane.b32.xlu0 %v2391, 20
      %v2410 = vpop.permute.xlu0 %2409
      %2411 = vrot.lane.b32.xlu0 %v2392, 20
      %v2412 = vpop.permute.xlu0 %2411
      %2413 = vrot.lane.b32.xlu0 %v2393, 20
      %v2414 = vpop.permute.xlu0 %2413
      %2415 = vrot.lane.b32.xlu0 %v2394, 20
      %v2416 = vpop.permute.xlu0 %2415
      %2417 = vrot.lane.b32.xlu0 %v2395, 20
      %v2418 = vpop.permute.xlu0 %2417
      %2419 = vrot.lane.b32.xlu0 %v2396, 20
      %v2420 = vpop.permute.xlu0 %2419
      %2421 = vrot.lane.b32.xlu0 %v2397, 20
      %v2422 = vpop.permute.xlu0 %2421
      %2423 = vrot.lane.b32.xlu0 %v2398, 20
      %v2424 = vpop.permute.xlu0 %2423
      %2425 = vrot.lane.b32.xlu0 %v2399, 20
      %v2426 = vpop.permute.xlu0 %2425
      %2427 = vrot.lane.b32.xlu0 %v2400, 20
      %v2428 = vpop.permute.xlu0 %2427
      %2429 = vrot.lane.b32.xlu0 %v2401, 20
      %v2430 = vpop.permute.xlu0 %2429
      %2431 = vrot.lane.b32.xlu0 %v2402, 20
      %v2432 = vpop.permute.xlu0 %2431
      %2433 = vrot.lane.b32.xlu0 %v2403, 20
      %v2434 = vpop.permute.xlu0 %2433
      %2435 = vrot.lane.b32.xlu0 %v2404, 20
      %v2436 = vpop.permute.xlu0 %2435
      %v2437 = vunpack.c.l.b16 %v1397
      %v2438 = vunpack.c.l.b16 %v1398
      %v2439 = vunpack.c.l.b16 %v1400
      %v2440 = vunpack.c.l.b16 %v1401
      %v2441 = vunpack.c.l.b16 %v1403
      %v2442 = vunpack.c.l.b16 %v1404
      %v2443 = vunpack.c.l.b16 %v1406
      %v2444 = vunpack.c.l.b16 %v1407
      %v2445 = vunpack.c.l.b16 %v1409
      %v2446 = vunpack.c.l.b16 %v1410
      %v2447 = vunpack.c.l.b16 %v1412
      %v2448 = vunpack.c.l.b16 %v1413
      %v2449 = vunpack.c.l.b16 %v1415
      %v2450 = vunpack.c.l.b16 %v1416
      %v2451 = vunpack.c.l.b16 %v1418
      %v2452 = vunpack.c.l.b16 %v1419
      %v2453 = vunpack.c.l.b16 %v1421
      %v2454 = vunpack.c.l.b16 %v1422
      %v2455 = vunpack.c.l.b16 %v1424
      %v2456 = vunpack.c.l.b16 %v1425
      %v2457 = vunpack.c.l.b16 %v1427
      %v2458 = vunpack.c.l.b16 %v1428
      %v2459 = vunpack.c.l.b16 %v1430
      %v2460 = vunpack.c.l.b16 %v1431
      %v2461 = vunpack.c.l.b16 %v1433
      %v2462 = vunpack.c.l.b16 %v1434
      %v2463 = vunpack.c.l.b16 %v1436
      %v2464 = vunpack.c.l.b16 %v1437
      %v2465 = vunpack.c.l.b16 %v1439
      %v2466 = vunpack.c.l.b16 %v1440
      %v2467 = vunpack.c.l.b16 %v1442
      %v2468 = vunpack.c.l.b16 %v1443
      %v2469 = vpack.c.b16 %v2438, %v2437
      %v2470 = vpack.c.b16 %v2440, %v2439
      %v2471 = vpack.c.b16 %v2442, %v2441
      %v2472 = vpack.c.b16 %v2444, %v2443
      %v2473 = vpack.c.b16 %v2446, %v2445
      %v2474 = vpack.c.b16 %v2448, %v2447
      %v2475 = vpack.c.b16 %v2450, %v2449
      %v2476 = vpack.c.b16 %v2452, %v2451
      %v2477 = vpack.c.b16 %v2454, %v2453
      %v2478 = vpack.c.b16 %v2456, %v2455
      %v2479 = vpack.c.b16 %v2458, %v2457
      %v2480 = vpack.c.b16 %v2460, %v2459
      %v2481 = vpack.c.b16 %v2462, %v2461
      %v2482 = vpack.c.b16 %v2464, %v2463
      %v2483 = vpack.c.b16 %v2466, %v2465
      %v2484 = vpack.c.b16 %v2468, %v2467
      %2485 = vrot.lane.b32.xlu0 %v2469, 24
      %v2486 = vpop.permute.xlu0 %2485
      %2487 = vrot.lane.b32.xlu0 %v2470, 24
      %v2488 = vpop.permute.xlu0 %2487
      %2489 = vrot.lane.b32.xlu0 %v2471, 24
      %v2490 = vpop.permute.xlu0 %2489
      %2491 = vrot.lane.b32.xlu0 %v2472, 24
      %v2492 = vpop.permute.xlu0 %2491
      %2493 = vrot.lane.b32.xlu0 %v2473, 24
      %v2494 = vpop.permute.xlu0 %2493
      %2495 = vrot.lane.b32.xlu0 %v2474, 24
      %v2496 = vpop.permute.xlu0 %2495
      %2497 = vrot.lane.b32.xlu0 %v2475, 24
      %v2498 = vpop.permute.xlu0 %2497
      %2499 = vrot.lane.b32.xlu0 %v2476, 24
      %v2500 = vpop.permute.xlu0 %2499
      %2501 = vrot.lane.b32.xlu0 %v2477, 24
      %v2502 = vpop.permute.xlu0 %2501
      %2503 = vrot.lane.b32.xlu0 %v2478, 24
      %v2504 = vpop.permute.xlu0 %2503
      %2505 = vrot.lane.b32.xlu0 %v2479, 24
      %v2506 = vpop.permute.xlu0 %2505
      %2507 = vrot.lane.b32.xlu0 %v2480, 24
      %v2508 = vpop.permute.xlu0 %2507
      %2509 = vrot.lane.b32.xlu0 %v2481, 24
      %v2510 = vpop.permute.xlu0 %2509
      %2511 = vrot.lane.b32.xlu0 %v2482, 24
      %v2512 = vpop.permute.xlu0 %2511
      %2513 = vrot.lane.b32.xlu0 %v2483, 24
      %v2514 = vpop.permute.xlu0 %2513
      %2515 = vrot.lane.b32.xlu0 %v2484, 24
      %v2516 = vpop.permute.xlu0 %2515
      %v2517 = vunpack.c.l.b16 %v1458
      %v2518 = vunpack.c.l.b16 %v1468
      %v2519 = vunpack.c.l.b16 %v1482
      %v2520 = vunpack.c.l.b16 %v1492
      %v2521 = vunpack.c.l.b16 %v1506
      %v2522 = vunpack.c.l.b16 %v1516
      %v2523 = vunpack.c.l.b16 %v1530
      %v2524 = vunpack.c.l.b16 %v1540
      %v2525 = vunpack.c.l.b16 %v1554
      %v2526 = vunpack.c.l.b16 %v1564
      %v2527 = vunpack.c.l.b16 %v1578
      %v2528 = vunpack.c.l.b16 %v1588
      %v2529 = vunpack.c.l.b16 %v1602
      %v2530 = vunpack.c.l.b16 %v1612
      %v2531 = vunpack.c.l.b16 %v1626
      %v2532 = vunpack.c.l.b16 %v1636
      %v2533 = vunpack.c.l.b16 %v1650
      %v2534 = vunpack.c.l.b16 %v1660
      %v2535 = vunpack.c.l.b16 %v1674
      %v2536 = vunpack.c.l.b16 %v1684
      %v2537 = vunpack.c.l.b16 %v1698
      %v2538 = vunpack.c.l.b16 %v1708
      %v2539 = vunpack.c.l.b16 %v1722
      %v2540 = vunpack.c.l.b16 %v1732
      %v2541 = vunpack.c.l.b16 %v1746
      %v2542 = vunpack.c.l.b16 %v1756
      %v2543 = vunpack.c.l.b16 %v1770
      %v2544 = vunpack.c.l.b16 %v1780
      %v2545 = vunpack.c.l.b16 %v1794
      %v2546 = vunpack.c.l.b16 %v1804
      %v2547 = vunpack.c.l.b16 %v1818
      %v2548 = vunpack.c.l.b16 %v1828
      %v2549 = vpack.c.b16 %v2518, %v2517
      %v2550 = vpack.c.b16 %v2520, %v2519
      %v2551 = vpack.c.b16 %v2522, %v2521
      %v2552 = vpack.c.b16 %v2524, %v2523
      %v2553 = vpack.c.b16 %v2526, %v2525
      %v2554 = vpack.c.b16 %v2528, %v2527
      %v2555 = vpack.c.b16 %v2530, %v2529
      %v2556 = vpack.c.b16 %v2532, %v2531
      %v2557 = vpack.c.b16 %v2534, %v2533
      %v2558 = vpack.c.b16 %v2536, %v2535
      %v2559 = vpack.c.b16 %v2538, %v2537
      %v2560 = vpack.c.b16 %v2540, %v2539
      %v2561 = vpack.c.b16 %v2542, %v2541
      %v2562 = vpack.c.b16 %v2544, %v2543
      %v2563 = vpack.c.b16 %v2546, %v2545
      %v2564 = vpack.c.b16 %v2548, %v2547
      %2565 = vrot.lane.b32.xlu0 %v2549, 28
      %v2566 = vpop.permute.xlu0 %2565
      %2567 = vrot.lane.b32.xlu0 %v2550, 28
      %v2568 = vpop.permute.xlu0 %2567
      %2569 = vrot.lane.b32.xlu0 %v2551, 28
      %v2570 = vpop.permute.xlu0 %2569
      %2571 = vrot.lane.b32.xlu0 %v2552, 28
      %v2572 = vpop.permute.xlu0 %2571
      %2573 = vrot.lane.b32.xlu0 %v2553, 28
      %v2574 = vpop.permute.xlu0 %2573
      %2575 = vrot.lane.b32.xlu0 %v2554, 28
      %v2576 = vpop.permute.xlu0 %2575
      %2577 = vrot.lane.b32.xlu0 %v2555, 28
      %v2578 = vpop.permute.xlu0 %2577
      %2579 = vrot.lane.b32.xlu0 %v2556, 28
      %v2580 = vpop.permute.xlu0 %2579
      %2581 = vrot.lane.b32.xlu0 %v2557, 28
      %v2582 = vpop.permute.xlu0 %2581
      %2583 = vrot.lane.b32.xlu0 %v2558, 28
      %v2584 = vpop.permute.xlu0 %2583
      %2585 = vrot.lane.b32.xlu0 %v2559, 28
      %v2586 = vpop.permute.xlu0 %2585
      %2587 = vrot.lane.b32.xlu0 %v2560, 28
      %v2588 = vpop.permute.xlu0 %2587
      %2589 = vrot.lane.b32.xlu0 %v2561, 28
      %v2590 = vpop.permute.xlu0 %2589
      %2591 = vrot.lane.b32.xlu0 %v2562, 28
      %v2592 = vpop.permute.xlu0 %2591
      %2593 = vrot.lane.b32.xlu0 %v2563, 28
      %v2594 = vpop.permute.xlu0 %2593
      %2595 = vrot.lane.b32.xlu0 %v2564, 28
      %v2596 = vpop.permute.xlu0 %2595
      %v2597 = vunpack.c.l.b16 %v1880
      %v2598 = vunpack.c.l.b16 %v1883
      %v2599 = vunpack.c.l.b16 %v1887
      %v2600 = vunpack.c.l.b16 %v1890
      %v2601 = vunpack.c.l.b16 %v1894
      %v2602 = vunpack.c.l.b16 %v1897
      %v2603 = vunpack.c.l.b16 %v1901
      %v2604 = vunpack.c.l.b16 %v1904
      %v2605 = vunpack.c.l.b16 %v1908
      %v2606 = vunpack.c.l.b16 %v1911
      %v2607 = vunpack.c.l.b16 %v1915
      %v2608 = vunpack.c.l.b16 %v1918
      %v2609 = vunpack.c.l.b16 %v1922
      %v2610 = vunpack.c.l.b16 %v1925
      %v2611 = vunpack.c.l.b16 %v1929
      %v2612 = vunpack.c.l.b16 %v1932
      %v2613 = vunpack.c.l.b16 %v1936
      %v2614 = vunpack.c.l.b16 %v1939
      %v2615 = vunpack.c.l.b16 %v1943
      %v2616 = vunpack.c.l.b16 %v1946
      %v2617 = vunpack.c.l.b16 %v1950
      %v2618 = vunpack.c.l.b16 %v1953
      %v2619 = vunpack.c.l.b16 %v1957
      %v2620 = vunpack.c.l.b16 %v1960
      %v2621 = vunpack.c.l.b16 %v1964
      %v2622 = vunpack.c.l.b16 %v1967
      %v2623 = vunpack.c.l.b16 %v1971
      %v2624 = vunpack.c.l.b16 %v1974
      %v2625 = vunpack.c.l.b16 %v1978
      %v2626 = vunpack.c.l.b16 %v1981
      %v2627 = vunpack.c.l.b16 %v1985
      %v2628 = vunpack.c.l.b16 %v1988
      %v2629 = vpack.c.b16 %v2598, %v2597
      %v2630 = vpack.c.b16 %v2600, %v2599
      %v2631 = vpack.c.b16 %v2602, %v2601
      %v2632 = vpack.c.b16 %v2604, %v2603
      %v2633 = vpack.c.b16 %v2606, %v2605
      %v2634 = vpack.c.b16 %v2608, %v2607
      %v2635 = vpack.c.b16 %v2610, %v2609
      %v2636 = vpack.c.b16 %v2612, %v2611
      %v2637 = vpack.c.b16 %v2614, %v2613
      %v2638 = vpack.c.b16 %v2616, %v2615
      %v2639 = vpack.c.b16 %v2618, %v2617
      %v2640 = vpack.c.b16 %v2620, %v2619
      %v2641 = vpack.c.b16 %v2622, %v2621
      %v2642 = vpack.c.b16 %v2624, %v2623
      %v2643 = vpack.c.b16 %v2626, %v2625
      %v2644 = vpack.c.b16 %v2628, %v2627
      %2645 = vrot.lane.b32.xlu0 %v2629, 32
      %v2646 = vpop.permute.xlu0 %2645
      %2647 = vrot.lane.b32.xlu0 %v2630, 32
      %v2648 = vpop.permute.xlu0 %2647
      %2649 = vrot.lane.b32.xlu0 %v2631, 32
      %v2650 = vpop.permute.xlu0 %2649
      %2651 = vrot.lane.b32.xlu0 %v2632, 32
      %v2652 = vpop.permute.xlu0 %2651
      %2653 = vrot.lane.b32.xlu0 %v2633, 32
      %v2654 = vpop.permute.xlu0 %2653
      %2655 = vrot.lane.b32.xlu0 %v2634, 32
      %v2656 = vpop.permute.xlu0 %2655
      %2657 = vrot.lane.b32.xlu0 %v2635, 32
      %v2658 = vpop.permute.xlu0 %2657
      %2659 = vrot.lane.b32.xlu0 %v2636, 32
      %v2660 = vpop.permute.xlu0 %2659
      %2661 = vrot.lane.b32.xlu0 %v2637, 32
      %v2662 = vpop.permute.xlu0 %2661
      %2663 = vrot.lane.b32.xlu0 %v2638, 32
      %v2664 = vpop.permute.xlu0 %2663
      %2665 = vrot.lane.b32.xlu0 %v2639, 32
      %v2666 = vpop.permute.xlu0 %2665
      %2667 = vrot.lane.b32.xlu0 %v2640, 32
      %v2668 = vpop.permute.xlu0 %2667
      %2669 = vrot.lane.b32.xlu0 %v2641, 32
      %v2670 = vpop.permute.xlu0 %2669
      %2671 = vrot.lane.b32.xlu0 %v2642, 32
      %v2672 = vpop.permute.xlu0 %2671
      %2673 = vrot.lane.b32.xlu0 %v2643, 32
      %v2674 = vpop.permute.xlu0 %2673
      %2675 = vrot.lane.b32.xlu0 %v2644, 32
      %v2676 = vpop.permute.xlu0 %2675
      %vm2677 = vcmask 31744
      %v2680 = vsel %vm2677, %v2021, %v2086
      %v2683 = vsel %vm2677, %v2022, %v2088
      %v2686 = vsel %vm2677, %v2023, %v2090
      %v2689 = vsel %vm2677, %v2024, %v2092
      %v2692 = vsel %vm2677, %v2025, %v2094
      %v2695 = vsel %vm2677, %v2026, %v2096
      %v2698 = vsel %vm2677, %v2027, %v2098
      %v2701 = vsel %vm2677, %v2028, %v2100
      %v2704 = vsel %vm2677, %v2029, %v2102
      %v2707 = vsel %vm2677, %v2030, %v2104
      %v2710 = vsel %vm2677, %v2031, %v2106
      %v2713 = vsel %vm2677, %v2032, %v2108
      %v2716 = vsel %vm2677, %v2033, %v2110
      %v2719 = vsel %vm2677, %v2034, %v2112
      %v2722 = vsel %vm2677, %v2035, %v2114
      %v2725 = vsel %vm2677, %v2036, %v2116
      %vm2726 = vcmask 64512
      %v2728 = vsel %vm2726, %v2680, %v2166
      %v2730 = vsel %vm2726, %v2683, %v2168
      %v2732 = vsel %vm2726, %v2686, %v2170
      %v2734 = vsel %vm2726, %v2689, %v2172
      %v2736 = vsel %vm2726, %v2692, %v2174
      %v2738 = vsel %vm2726, %v2695, %v2176
      %v2740 = vsel %vm2726, %v2698, %v2178
      %v2742 = vsel %vm2726, %v2701, %v2180
      %v2744 = vsel %vm2726, %v2704, %v2182
      %v2746 = vsel %vm2726, %v2707, %v2184
      %v2748 = vsel %vm2726, %v2710, %v2186
      %v2750 = vsel %vm2726, %v2713, %v2188
      %v2752 = vsel %vm2726, %v2716, %v2190
      %v2754 = vsel %vm2726, %v2719, %v2192
      %v2756 = vsel %vm2726, %v2722, %v2194
      %v2758 = vsel %vm2726, %v2725, %v2196
      %vm2759 = vcmask 97280
      %v2761 = vsel %vm2759, %v2728, %v2246
      %v2763 = vsel %vm2759, %v2730, %v2248
      %v2765 = vsel %vm2759, %v2732, %v2250
      %v2767 = vsel %vm2759, %v2734, %v2252
      %v2769 = vsel %vm2759, %v2736, %v2254
      %v2771 = vsel %vm2759, %v2738, %v2256
      %v2773 = vsel %vm2759, %v2740, %v2258
      %v2775 = vsel %vm2759, %v2742, %v2260
      %v2777 = vsel %vm2759, %v2744, %v2262
      %v2779 = vsel %vm2759, %v2746, %v2264
      %v2781 = vsel %vm2759, %v2748, %v2266
      %v2783 = vsel %vm2759, %v2750, %v2268
      %v2785 = vsel %vm2759, %v2752, %v2270
      %v2787 = vsel %vm2759, %v2754, %v2272
      %v2789 = vsel %vm2759, %v2756, %v2274
      %v2791 = vsel %vm2759, %v2758, %v2276
      %vm2792 = vcmask 130048
      %v2794 = vsel %vm2792, %v2761, %v2326
      %v2796 = vsel %vm2792, %v2763, %v2328
      %v2798 = vsel %vm2792, %v2765, %v2330
      %v2800 = vsel %vm2792, %v2767, %v2332
      %v2802 = vsel %vm2792, %v2769, %v2334
      %v2804 = vsel %vm2792, %v2771, %v2336
      %v2806 = vsel %vm2792, %v2773, %v2338
      %v2808 = vsel %vm2792, %v2775, %v2340
      %v2810 = vsel %vm2792, %v2777, %v2342
      %v2812 = vsel %vm2792, %v2779, %v2344
      %v2814 = vsel %vm2792, %v2781, %v2346
      %v2816 = vsel %vm2792, %v2783, %v2348
      %v2818 = vsel %vm2792, %v2785, %v2350
      %v2820 = vsel %vm2792, %v2787, %v2352
      %v2822 = vsel %vm2792, %v2789, %v2354
      %v2824 = vsel %vm2792, %v2791, %v2356
      %vm2825 = vcmask 162816
      %v2827 = vsel %vm2825, %v2794, %v2406
      %v2829 = vsel %vm2825, %v2796, %v2408
      %v2831 = vsel %vm2825, %v2798, %v2410
      %v2833 = vsel %vm2825, %v2800, %v2412
      %v2835 = vsel %vm2825, %v2802, %v2414
      %v2837 = vsel %vm2825, %v2804, %v2416
      %v2839 = vsel %vm2825, %v2806, %v2418
      %v2841 = vsel %vm2825, %v2808, %v2420
      %v2843 = vsel %vm2825, %v2810, %v2422
      %v2845 = vsel %vm2825, %v2812, %v2424
      %v2847 = vsel %vm2825, %v2814, %v2426
      %v2849 = vsel %vm2825, %v2816, %v2428
      %v2851 = vsel %vm2825, %v2818, %v2430
      %v2853 = vsel %vm2825, %v2820, %v2432
      %v2855 = vsel %vm2825, %v2822, %v2434
      %v2857 = vsel %vm2825, %v2824, %v2436
      %vm2858 = vcmask 195584
      %v2860 = vsel %vm2858, %v2827, %v2486
      %v2862 = vsel %vm2858, %v2829, %v2488
      %v2864 = vsel %vm2858, %v2831, %v2490
      %v2866 = vsel %vm2858, %v2833, %v2492
      %v2868 = vsel %vm2858, %v2835, %v2494
      %v2870 = vsel %vm2858, %v2837, %v2496
      %v2872 = vsel %vm2858, %v2839, %v2498
      %v2874 = vsel %vm2858, %v2841, %v2500
      %v2876 = vsel %vm2858, %v2843, %v2502
      %v2878 = vsel %vm2858, %v2845, %v2504
      %v2880 = vsel %vm2858, %v2847, %v2506
      %v2882 = vsel %vm2858, %v2849, %v2508
      %v2884 = vsel %vm2858, %v2851, %v2510
      %v2886 = vsel %vm2858, %v2853, %v2512
      %v2888 = vsel %vm2858, %v2855, %v2514
      %v2890 = vsel %vm2858, %v2857, %v2516
      %vm2891 = vcmask 228352
      %v2893 = vsel %vm2891, %v2860, %v2566
      %v2895 = vsel %vm2891, %v2862, %v2568
      %v2897 = vsel %vm2891, %v2864, %v2570
      %v2899 = vsel %vm2891, %v2866, %v2572
      %v2901 = vsel %vm2891, %v2868, %v2574
      %v2903 = vsel %vm2891, %v2870, %v2576
      %v2905 = vsel %vm2891, %v2872, %v2578
      %v2907 = vsel %vm2891, %v2874, %v2580
      %v2909 = vsel %vm2891, %v2876, %v2582
      %v2911 = vsel %vm2891, %v2878, %v2584
      %v2913 = vsel %vm2891, %v2880, %v2586
      %v2915 = vsel %vm2891, %v2882, %v2588
      %v2917 = vsel %vm2891, %v2884, %v2590
      %v2919 = vsel %vm2891, %v2886, %v2592
      %v2921 = vsel %vm2891, %v2888, %v2594
      %v2923 = vsel %vm2891, %v2890, %v2596
      %vm2924 = vcmask 261120
      %v2926 = vsel %vm2924, %v2893, %v2646
      %v2928 = vsel %vm2924, %v2895, %v2648
      %v2930 = vsel %vm2924, %v2897, %v2650
      %v2932 = vsel %vm2924, %v2899, %v2652
      %v2934 = vsel %vm2924, %v2901, %v2654
      %v2936 = vsel %vm2924, %v2903, %v2656
      %v2938 = vsel %vm2924, %v2905, %v2658
      %v2940 = vsel %vm2924, %v2907, %v2660
      %v2942 = vsel %vm2924, %v2909, %v2662
      %v2944 = vsel %vm2924, %v2911, %v2664
      %v2946 = vsel %vm2924, %v2913, %v2666
      %v2948 = vsel %vm2924, %v2915, %v2668
      %v2950 = vsel %vm2924, %v2917, %v2670
      %v2952 = vsel %vm2924, %v2919, %v2672
      %v2954 = vsel %vm2924, %v2921, %v2674
      %v2956 = vsel %vm2924, %v2923, %v2676
      %v2957 = vld [vmem:[%s1] sm:$0xf]
      %v2958 = vld [vmem:[%s2] sm:$0xff]
      %2960 = vset.pattern.permute.xlu0 0
      %2961 = vperm.xlu0 %2960, %v2958
      %v2962 = vpop.permute.xlu0 %2961
      %vm2964 = vcmask 293888
      %v2966 = vsel %vm2964, %v2957, 0
      %v2968 = vsel %vm2964, %v2926, 0
      %v2970 = vsel %vm2964, %v2928, 0
      %v2972 = vsel %vm2964, %v2930, 0
      %v2974 = vsel %vm2964, %v2932, 0
      %v2976 = vsel %vm2964, %v2934, 0
      %v2978 = vsel %vm2964, %v2936, 0
      %v2980 = vsel %vm2964, %v2938, 0
      %v2982 = vsel %vm2964, %v2940, 0
      %v2984 = vsel %vm2964, %v2942, 0
      %v2986 = vsel %vm2964, %v2944, 0
      %v2988 = vsel %vm2964, %v2946, 0
      %v2990 = vsel %vm2964, %v2948, 0
      %v2992 = vsel %vm2964, %v2950, 0
      %v2994 = vsel %vm2964, %v2952, 0
      %v2996 = vsel %vm2964, %v2954, 0
      %v2998 = vsel %vm2964, %v2956, 0
      %3000 = vmatprep.subr.bf16.mxu0 0
      %3001 = vmatpush1.bf16.xpose.msra.mxu0 %v2968
      %3002 = vmatprep.subr.bf16.mxu0 0
      %3003 = vmatpush1.bf16.xpose.msra.mxu0 %v2970
      %3004 = vmatprep.subr.bf16.mxu0 0
      %3005 = vmatpush1.bf16.xpose.msra.mxu0 %v2972
      %3006 = vmatprep.subr.bf16.mxu0 0
      %3007 = vmatpush1.bf16.xpose.msra.mxu0 %v2974
      %3008 = vmatprep.subr.bf16.mxu0 0
      %3009 = vmatpush1.bf16.xpose.msra.mxu0 %v2976
      %3010 = vmatprep.subr.bf16.mxu0 0
      %3011 = vmatpush1.bf16.xpose.msra.mxu0 %v2978
      %3012 = vmatprep.subr.bf16.mxu0 0
      %3013 = vmatpush1.bf16.xpose.msra.mxu0 %v2980
      %3014 = vmatprep.subr.bf16.mxu0 0
      %3015 = vmatpush1.bf16.xpose.msra.mxu0 %v2982
      %3016 = vmatprep.subr.bf16.mxu0 0
      %3017 = vmatpush1.bf16.xpose.msra.mxu0 %v2984
      %3018 = vmatprep.subr.bf16.mxu0 0
      %3019 = vmatpush1.bf16.xpose.msra.mxu0 %v2986
      %3020 = vmatprep.subr.bf16.mxu0 0
      %3021 = vmatpush1.bf16.xpose.msra.mxu0 %v2988
      %3022 = vmatprep.subr.bf16.mxu0 0
      %3023 = vmatpush1.bf16.xpose.msra.mxu0 %v2990
      %3024 = vmatprep.subr.bf16.mxu0 0
      %3025 = vmatpush1.bf16.xpose.msra.mxu0 %v2992
      %3026 = vmatprep.subr.bf16.mxu0 0
      %3027 = vmatpush1.bf16.xpose.msra.mxu0 %v2994
      %3028 = vmatprep.subr.bf16.mxu0 0
      %3029 = vmatpush1.bf16.xpose.msra.mxu0 %v2996
      %3030 = vmatprep.subr.bf16.mxu0 0
      %3031 = vmatpush1.bf16.xpose.msra.mxu0 %v2998
      %3032 = vmatprep.mubr.bf16.mxu0 0
      %3033 = vmatmul.mubr.bf16.gmra.mrb[0].mxu0 %v2966
      %v3034 = vpop.f32.mrb[0].mxu0
      %v3035 = vadd.f32 %v2962, %v3034
      %v3036 = vpop.f32.mrb[0].mxu0
      %v3037 = vadd.f32 %v2962, %v3036
      %v3038 = vpop.f32.mrb[0].mxu0
      %v3039 = vpop.f32.mrb[0].mxu0
      %3040 = vdwg.mxu0
      %3041 = vst [vmem:[%s192] sm:$0xff] %v3035
      %3042 = vst [vmem:[%s192 + $0x8] sm:$0xff] %v3037
      %s3043 = smul.u32 2, %s19
      %p3044 = scmp.lt.s32.totalorder %s18, 1
      %s3045 = scalar_select %p3044, %s18, 1
      %p3046 = scmp.lt.s32.totalorder %s3043, 1
      %s3047 = scalar_select %p3046, %s3043, 1
      %s3048 = smul.addr %s3045, 2
      %s3049 = sadd.s32 %s3047, %s3048
      %s3050 = smul.addr %s3049, 8
      %s3051 = scalar_lea.vmem %s3, %s3050
      // Predicated region
      $region33: #{conv_layer_forward.1} parent=31 // pred_check
        %p3052 = pneg %p114
      $region34: #{conv_layer_forward.1} parent=31 // pred_check_branch
        %3054 = sbr.rel (%p3052) target = $region36
      $region35: #{conv_layer_forward.1} parent=31 // pred_region
        %s3055 = smul.u32 2, %s19
      $region36: #{conv_layer_forward.1} parent=31 // pred_fallthru
        _
    $region32: #{conv_layer_forward.1} parent=5 // pred_fallthru
      _
    %p3056 = scmp.le.s32.totalorder 2, %s9
    // Predicated region
    $region37: #{conv_layer_forward.1} parent=5 // pred_check
      %p3057 = pneg %p3056
    $region38: #{conv_layer_forward.1} parent=5 // pred_check_branch
      %3059 = sbr.rel (%p3057) target = $region40
    $region39: #{conv_layer_forward.1} parent=5 // pred_region
      %s3060 = ssub.s32 %s9, 2
      // Predicated region
      $region41: #{conv_layer_forward.1} parent=39 // pred_check
        %p3061 = pneg %p120
      $region42: #{conv_layer_forward.1} parent=39 // pred_check_branch
        %3063 = sbr.rel (%p3061) target = $region44
      $region43: #{conv_layer_forward.1} parent=39 // pred_region
        %s3064 = smul.u32 2, %s21
        %p3065 = scmp.lt.s32.totalorder %s20, 1
        %s3066 = scalar_select %p3065, %s20, 1
        %p3067 = scmp.lt.s32.totalorder %s3064, 1
        %s3068 = scalar_select %p3067, %s3064, 1
        %s3069 = smul.addr %s3066, 2
        %s3070 = sadd.s32 %s3068, %s3069
        %s3071 = smul.addr %s3070, 8
        %s3072 = scalar_lea.vmem %s3, %s3071
      $region44: #{conv_layer_forward.1} parent=39 // pred_fallthru
        _
    $region40: #{conv_layer_forward.1} parent=5 // pred_fallthru
      _
  $region6: #{conv_layer_forward.1} parent=0 // loop_footer
    %s13 = sadd.s32 1, %s9
  $region7: #{conv_layer_forward.1} parent=0 // loop_footer_branch
    %8 = sbr.rel target = $region3
  $region8: #{conv_layer_forward.1} parent=0 // loop_exit
    _

</llo_original>
